<compile_context>
chip_gen: v5e
topology: v5e:2x2
jax: 0.10.0
libtpu: 0.0.40
codegen_flags: <defaults>
</compile_context>

<pallas_src>
import functools

import jax
import jax.numpy as jnp
from jax.experimental import pallas as pl
from jax.experimental.pallas import tpu as pltpu


_VMEM_SPEC = pl.BlockSpec(memory_space=pltpu.MemorySpace.VMEM)

# fused gate-chunk order (each chunk is [fwd H | bwd H]); source gate order is
# PyTorch's i, f, g, o -> we emit i, f, o, g so all sigmoid gates are contiguous.
_GATE_ORDER = (0, 1, 3, 2)  # i, f, o, g


# ----------------------------------------------------------------------------
# Wrapper-side weight fusion.
# ----------------------------------------------------------------------------
def _fuse_ih(w_f, w_b, H):
    """(Din, 4H) fwd/bwd (gate order i,f,g,o) -> (Din, 8H) [i|f|o|g], each chunk [fwd|bwd]."""
    chunks = []
    for g in _GATE_ORDER:
        chunks.append(w_f[:, g * H:(g + 1) * H])
        chunks.append(w_b[:, g * H:(g + 1) * H])
    return jnp.concatenate(chunks, axis=1)


def _fuse_hh(w_hh_f, w_hh_b, H):
    """(H, 4H) fwd/bwd -> block-diagonal (2H, 8H) acting on hcat = [h_f | h_b]."""
    z = jnp.zeros((H, H), w_hh_f.dtype)
    chunks = []
    for g in _GATE_ORDER:
        chunks.append(jnp.concatenate([w_hh_f[:, g * H:(g + 1) * H], z], axis=0))
        chunks.append(jnp.concatenate([z, w_hh_b[:, g * H:(g + 1) * H]], axis=0))
    return jnp.concatenate(chunks, axis=1)


# ----------------------------------------------------------------------------
# Fused Pallas kernel: all layers, both directions, sum-over-time head.
# ----------------------------------------------------------------------------
def _bilstm_fused_kernel(*refs, hidden_dim, n_layers, seq_len, batch):
    """Fully fused BiLSTM forward.

    ref layout (positional):
      [0]            x_ref      : (T*B, E)      time-major flattened embeddings
      [1 .. 3L]      per layer:  w_ih_cat (Din, 8H), w_hh_blk (2H, 8H), b_cat (1, 8H)
      [3L+1]         fc_w_ref   : (2H, 13)
      [3L+2]         fc_b_ref   : (1, 13)
      [3L+3]         logits_ref : (B, 13)            (output)
      [3L+4]         hN_ref     : (L, B, 2H)         (output, [fwd|bwd] per layer)
      [3L+5]         cN_ref     : (L, B, 2H)         (output, [fwd|bwd] per layer)
    """
    H, T, B = hidden_dim, seq_len, batch
    n_w = n_layers * 3

    x_ref = refs[0]
    w_refs = refs[1:1 + n_w]
    fc_w_ref = refs[1 + n_w]
    fc_b_ref = refs[2 + n_w]
    logits_ref = refs[3 + n_w]
    hN_ref = refs[4 + n_w]
    cN_ref = refs[5 + n_w]

    # Lane masks, built once (hoisted out of all loops).
    gate_lane = jax.lax.broadcasted_iota(jnp.int32, (B, 8 * H), 1)
    fwd_gate_mask = (gate_lane % (2 * H)) < H          # fwd half of every gate chunk
    half_lane = jax.lax.broadcasted_iota(jnp.int32, (B, 2 * H), 1)
    fwd_half_mask = half_lane < H                       # fwd half of [h_f | h_b]

    cur_in = x_ref[...]                                 # (T*B, Din); Din = E for layer 0

    for layer in range(n_layers):
        w_ih = w_refs[3 * layer + 0][...]               # (Din, 8H)
        w_hh = w_refs[3 * layer + 1][...]               # (2H, 8H) block-diagonal
        b = w_refs[3 * layer + 2][...]                  # (1, 8H)

        # Hoisted fused input projection for ALL timesteps and BOTH directions:
        # one (T*B, Din) @ (Din, 8H) matmul per layer, bias folded in.
        gx = jnp.dot(cur_in, w_ih, preferred_element_type=jnp.float32) + b

        hcat = jnp.zeros((B, 2 * H), jnp.float32)       # [h_f | h_b]
        ccat = jnp.zeros((B, 2 * H), jnp.float32)       # [c_f | c_b]
        is_last = layer == n_layers - 1
        s_cat = jnp.zeros((B, 2 * H), jnp.float32)      # sum over time (last layer)
        hs = []                                         # per-step hcat (intermediate layers)

        for t in range(T):                              # fully unrolled: T static & small
            tb = T - 1 - t
            gx_t = gx[t * B:(t + 1) * B, :]
            if t == tb:
                gx_sel = gx_t
            else:
                # fwd gate columns take time t, bwd gate columns take time T-1-t.
                gx_sel = jnp.where(fwd_gate_mask, gx_t, gx[tb * B:(tb + 1) * B, :])

            # ONE recurrent matmul per step covering both directions.
            gates = gx_sel + jnp.dot(hcat, w_hh, preferred_element_type=jnp.float32)

            # gate layout: [ i (2H) | f (2H) | o (2H) | g (2H) ]
            sig = jax.nn.sigmoid(gates[:, :6 * H])      # i | f | o in one EUP pass
            g_g = jnp.tanh(gates[:, 6 * H:])
            i_g = sig[:, 0:2 * H]
            f_g = sig[:, 2 * H:4 * H]
            o_g = sig[:, 4 * H:6 * H]
            ccat = f_g * ccat + i_g * g_g
            hcat = o_g * jnp.tanh(ccat)

            if is_last:
                s_cat = s_cat + hcat                    # never materialize (T,B,2H)
            else:
                hs.append(hcat)

        if is_last:
            # head: ReLU(sum_t [h_f | h_b]) @ fc_w + fc_b
            s = jnp.maximum(s_cat, 0.0)
            logits_ref[...] = (
                jnp.dot(s, fc_w_ref[...], preferred_element_type=jnp.float32)
                + fc_b_ref[...])
        else:
            # Build next-layer input entirely in registers: time-step tau needs
            # [h_f(tau) | h_b(tau)] = fwd half of hs[tau] + bwd half of hs[T-1-tau].
            rows = [jnp.where(fwd_half_mask, hs[tau], hs[T - 1 - tau])
                    for tau in range(T)]
            cur_in = jnp.concatenate(rows, axis=0)      # (T*B, 2H)

        # Final states: after the last unrolled step hcat = [h_f(T-1) | h_b(0)].
        hN_ref[layer] = hcat
        cN_ref[layer] = ccat


# ----------------------------------------------------------------------------
# Full BiLSTM forward: embedding gather as glue, everything else in ONE kernel.
# ----------------------------------------------------------------------------
def bilstm_forward(params, input_ids):
    """input_ids: (B, T) int32.  Returns (logits (B,13), (h_n, c_n))."""
    H = params["hidden_dim"]
    n_layers = params["n_layers"]
    B, T = input_ids.shape
    target = params["fc_w"].shape[1]

    # Pad batch to a sublane multiple (8 rows for f32); padded rows are
    # independent garbage lanes and are sliced off at the end.
    B_pad = max(8, ((B + 7) // 8) * 8)
    if B_pad != B:
        input_ids = jnp.pad(input_ids, ((0, B_pad - B), (0, 0)))

    # Embedding lookup kept as glue, built directly in time-major layout.
    # TODO(synk): move the gather in-kernel (scalar prefetch + per-row DMA) for
    #             large vocab / long sequences.
    ids_tm = jnp.transpose(input_ids).reshape(-1)                    # (T*B_pad,)
    x = jnp.take(params["embedding"], ids_tm, axis=0)                # (T*B_pad, E)

    # Fuse per-layer weights: both directions into one set of matrices.
    weights = []
    for layer in range(n_layers):
        lf = params["layers"][layer]["fwd"]
        lb = params["layers"][layer]["bwd"]
        weights += [_fuse_ih(lf["w_ih"], lb["w_ih"], H),
                    _fuse_hh(lf["w_hh"], lb["w_hh"], H),
                    _fuse_ih(lf["b"], lb["b"], H)]

    out_shapes = (
        jax.ShapeDtypeStruct((B_pad, target), jnp.float32),
        jax.ShapeDtypeStruct((n_layers, B_pad, 2 * H), jnp.float32),
        jax.ShapeDtypeStruct((n_layers, B_pad, 2 * H), jnp.float32),
    )

    # Explicit VMEM budget (inputs + outputs + hoisted gx + inter-layer acts),
    # with 2x headroom, clamped so it also fits v7x's 64 MiB physical VMEM.
    f32 = 4
    est = x.size * f32
    est += sum(int(w.size) for w in weights) * f32
    est += (params["fc_w"].size + params["fc_b"].size) * f32
    est += (B_pad * target + 2 * n_layers * B_pad * 2 * H) * f32
    est += T * B_pad * 8 * H * f32            # hoisted gate projection
    est += T * B_pad * 2 * H * f32            # inter-layer activations (in vregs)
    vmem_budget = int(min(60 * 1024 * 1024, max(4 * 1024 * 1024, 2 * est + (1 << 20))))

    kernel = functools.partial(_bilstm_fused_kernel, hidden_dim=H,
                               n_layers=n_layers, seq_len=T, batch=B_pad)
    n_in = 1 + len(weights) + 2

    logits, hN, cN = pl.pallas_call(
        kernel,
        out_shape=out_shapes,
        in_specs=[_VMEM_SPEC] * n_in,
        out_specs=(_VMEM_SPEC,) * 3,
        compiler_params=pltpu.CompilerParams(vmem_limit_bytes=vmem_budget),
    )(x, *weights, params["fc_w"], params["fc_b"])

    logits = logits[:B]
    # (L, B_pad, 2H) -> PyTorch (2L, B, H): layer0-fwd, layer0-bwd, layer1-fwd, ...
    h_n = (hN.reshape(n_layers, B_pad, 2, H)
             .transpose(0, 2, 1, 3)
             .reshape(n_layers * 2, B_pad, H)[:, :B])
    c_n = (cN.reshape(n_layers, B_pad, 2, H)
             .transpose(0, 2, 1, 3)
             .reshape(n_layers * 2, B_pad, H)[:, :B])
    return logits, (h_n, c_n)


# ----------------------------------------------------------------------------
# Deterministic parameter init (uniform(-1/sqrt(H), 1/sqrt(H)), like PyTorch)
# ----------------------------------------------------------------------------
def init_params(key, vocab_size, embedding_dim, hidden_dim, n_layers, target_size):
    bound = 1.0 / jnp.sqrt(hidden_dim)
    keys = iter(jax.random.split(key, 4 + n_layers * 2 * 4))

    def u(k, shape, b):
        return jax.random.uniform(k, shape, jnp.float32, -b, b)

    params = {
        "hidden_dim": hidden_dim,
        "n_layers": n_layers,
        "embedding": jax.random.normal(next(keys), (vocab_size, embedding_dim),
                                       jnp.float32),
        "fc_w": u(next(keys), (2 * hidden_dim, target_size),
                  1.0 / jnp.sqrt(2 * hidden_dim)),
        "fc_b": u(next(keys), (1, target_size), 1.0 / jnp.sqrt(2 * hidden_dim)),
        "layers": [],
    }
    for layer in range(n_layers):
        d_in = embedding_dim if layer == 0 else 2 * hidden_dim
        layer_p = {}
        for direction in ("fwd", "bwd"):
            w_ih = u(next(keys), (d_in, 4 * hidden_dim), bound)
            w_hh = u(next(keys), (hidden_dim, 4 * hidden_dim), bound)
            b_ih = u(next(keys), (1, 4 * hidden_dim), bound)
            b_hh = u(next(keys), (1, 4 * hidden_dim), bound)
            layer_p[direction] = {"w_ih": w_ih, "w_hh": w_hh, "b": b_ih + b_hh}
        params["layers"].append(layer_p)
    return params


# ----------------------------------------------------------------------------
if __name__ == "__main__":
    key = jax.random.PRNGKey(0)
    k_param, k_ids = jax.random.split(key)

    # small shapes consistent with the module
    batch = 2
    seq_len = 8
    vocab_size = 50
    embedding_dim = 16
    hidden_dim = 32
    n_layers = 2
    target_size = 13

    params = init_params(k_param, vocab_size, embedding_dim, hidden_dim,
                         n_layers, target_size)
    input_ids = jax.random.randint(k_ids, (batch, seq_len), 0, vocab_size,
                                   dtype=jnp.int32)

    logits, (h_n, c_n) = bilstm_forward(params, input_ids)
    jax.block_until_ready((logits, h_n, c_n))

    assert logits.shape == (batch, target_size)
    assert h_n.shape == (n_layers * 2, batch, hidden_dim)
    assert c_n.shape == (n_layers * 2, batch, hidden_dim)
    assert bool(jnp.all(jnp.isfinite(logits)))
    print("KERNEL_OK")
</pallas_src>

<mosaic_0001>
module attributes {stable_mosaic.version = 11 : i64} {
  func.func @_bilstm_fused_kernel(%arg0: memref<64x16xf32, #tpu.memory_space<vmem>>, %arg1: memref<16x256xf32, #tpu.memory_space<vmem>>, %arg2: memref<64x256xf32, #tpu.memory_space<vmem>>, %arg3: memref<1x256xf32, #tpu.memory_space<vmem>>, %arg4: memref<64x256xf32, #tpu.memory_space<vmem>>, %arg5: memref<64x256xf32, #tpu.memory_space<vmem>>, %arg6: memref<1x256xf32, #tpu.memory_space<vmem>>, %arg7: memref<64x13xf32, #tpu.memory_space<vmem>>, %arg8: memref<1x13xf32, #tpu.memory_space<vmem>>, %arg9: memref<8x13xf32, #tpu.memory_space<vmem>>, %arg10: memref<2x8x64xf32, #tpu.memory_space<vmem>>, %arg11: memref<2x8x64xf32, #tpu.memory_space<vmem>>) attributes {dimension_semantics = [], scalar_prefetch = 0 : i64, scratch_operands = 0 : i64, tpu.core_type = #tpu.core_type<tc>} {
    %0 = tpu.iota {dimensions = array<i32: 1>} : vector<8x256xi32>
    %c64_i32 = arith.constant 64 : i32
    %c0_i32 = arith.constant 0 : i32
    %1 = arith.cmpi eq, %c64_i32, %c0_i32 : i32
    %c1_i32 = arith.constant 1 : i32
    %2 = arith.select %1, %c1_i32, %c64_i32 : i32
    %3 = vector.broadcast %2 : i32 to vector<8x256xi32>
    %4 = arith.remsi %0, %3 : vector<8x256xi32>
    %c0_i32_0 = arith.constant 0 : i32
    %5 = vector.broadcast %c0_i32_0 : i32 to vector<8x256xi32>
    %6 = arith.cmpi ne, %4, %5 : vector<8x256xi32>
    %c0_i32_1 = arith.constant 0 : i32
    %7 = vector.broadcast %c0_i32_1 : i32 to vector<8x256xi32>
    %8 = arith.cmpi slt, %4, %7 : vector<8x256xi32>
    %c0_i32_2 = arith.constant 0 : i32
    %9 = arith.cmpi slt, %2, %c0_i32_2 : i32
    %10 = vector.broadcast %9 : i1 to vector<8x256xi1>
    %11 = vector.broadcast %10 : vector<8x256xi1> to vector<8x256xi1>
    %12 = arith.xori %8, %11 : vector<8x256xi1>
    %13 = arith.andi %12, %6 : vector<8x256xi1>
    %14 = vector.broadcast %2 : i32 to vector<8x256xi32>
    %15 = arith.addi %4, %14 : vector<8x256xi32>
    %16 = arith.select %13, %15, %4 : vector<8x256xi1>, vector<8x256xi32>
    %c32_i32 = arith.constant 32 : i32
    %17 = vector.broadcast %c32_i32 : i32 to vector<8x256xi32>
    %18 = arith.cmpi slt, %16, %17 : vector<8x256xi32>
    %19 = tpu.iota {dimensions = array<i32: 1>} : vector<8x64xi32>
    %c32_i32_3 = arith.constant 32 : i32
    %20 = vector.broadcast %c32_i32_3 : i32 to vector<8x64xi32>
    %21 = arith.cmpi slt, %19, %20 : vector<8x64xi32>
    %c0 = arith.constant 0 : index
    %c0_4 = arith.constant 0 : index
    %22 = vector.load %arg0[%c0, %c0_4] : memref<64x16xf32, #tpu.memory_space<vmem>>, vector<64x16xf32>
    %c0_5 = arith.constant 0 : index
    %c0_6 = arith.constant 0 : index
    %23 = vector.load %arg1[%c0_5, %c0_6] : memref<16x256xf32, #tpu.memory_space<vmem>>, vector<16x256xf32>
    %c0_7 = arith.constant 0 : index
    %c0_8 = arith.constant 0 : index
    %24 = vector.load %arg2[%c0_7, %c0_8] : memref<64x256xf32, #tpu.memory_space<vmem>>, vector<64x256xf32>
    %c0_9 = arith.constant 0 : index
    %c0_10 = arith.constant 0 : index
    %25 = vector.load %arg3[%c0_9, %c0_10] : memref<1x256xf32, #tpu.memory_space<vmem>>, vector<1x256xf32>
    %cst = arith.constant dense<0.000000e+00> : vector<64x256xf32>
    %26 = tpu.matmul %22, %23, %cst {dimension_numbers = #tpu.dot_dimension_numbers<[1], [0], [0], [1], [0, 0, 1, 1], [], []>} : vector<64x16xf32>, vector<16x256xf32>, vector<64x256xf32> -> vector<64x256xf32>
    %27 = vector.broadcast %25 : vector<1x256xf32> to vector<64x256xf32>
    %28 = arith.addf %26, %27 : vector<64x256xf32>
    %cst_11 = arith.constant 0.000000e+00 : f32
    %29 = vector.broadcast %cst_11 : f32 to vector<8x64xf32>
    %cst_12 = arith.constant 0.000000e+00 : f32
    %30 = vector.broadcast %cst_12 : f32 to vector<8x64xf32>
    %31 = vector.extract_strided_slice %28 {offsets = [0, 0], sizes = [8, 256], strides = [1, 1]} : vector<64x256xf32> to vector<8x256xf32>
    %32 = vector.extract_strided_slice %28 {offsets = [56, 0], sizes = [8, 256], strides = [1, 1]} : vector<64x256xf32> to vector<8x256xf32>
    %33 = arith.select %18, %31, %32 : vector<8x256xi1>, vector<8x256xf32>
    %cst_13 = arith.constant dense<0.000000e+00> : vector<8x256xf32>
    %34 = tpu.matmul %29, %24, %cst_13 {dimension_numbers = #tpu.dot_dimension_numbers<[1], [0], [0], [1], [0, 0, 1, 1], [], []>} : vector<8x64xf32>, vector<64x256xf32>, vector<8x256xf32> -> vector<8x256xf32>
    %35 = arith.addf %33, %34 : vector<8x256xf32>
    %36 = vector.extract_strided_slice %35 {offsets = [0, 0], sizes = [8, 192], strides = [1, 1]} : vector<8x256xf32> to vector<8x192xf32>
    %37 = arith.negf %36 : vector<8x192xf32>
    %38 = math.exp %37 : vector<8x192xf32>
    %cst_14 = arith.constant 1.000000e+00 : f32
    %39 = vector.broadcast %cst_14 : f32 to vector<8x192xf32>
    %40 = arith.addf %39, %38 : vector<8x192xf32>
    %41 = arith.divf %39, %40 : vector<8x192xf32>
    %42 = vector.extract_strided_slice %35 {offsets = [0, 192], sizes = [8, 64], strides = [1, 1]} : vector<8x256xf32> to vector<8x64xf32>
    %43 = math.tanh %42 : vector<8x64xf32>
    %44 = vector.extract_strided_slice %41 {offsets = [0, 0], sizes = [8, 64], strides = [1, 1]} : vector<8x192xf32> to vector<8x64xf32>
    %45 = vector.extract_strided_slice %41 {offsets = [0, 64], sizes = [8, 64], strides = [1, 1]} : vector<8x192xf32> to vector<8x64xf32>
    %46 = vector.extract_strided_slice %41 {offsets = [0, 128], sizes = [8, 64], strides = [1, 1]} : vector<8x192xf32> to vector<8x64xf32>
    %47 = arith.mulf %45, %30 : vector<8x64xf32>
    %48 = arith.mulf %44, %43 : vector<8x64xf32>
    %49 = arith.addf %47, %48 : vector<8x64xf32>
    %50 = math.tanh %49 : vector<8x64xf32>
    %51 = arith.mulf %46, %50 : vector<8x64xf32>
    %52 = vector.extract_strided_slice %28 {offsets = [8, 0], sizes = [8, 256], strides = [1, 1]} : vector<64x256xf32> to vector<8x256xf32>
    %53 = vector.extract_strided_slice %28 {offsets = [48, 0], sizes = [8, 256], strides = [1, 1]} : vector<64x256xf32> to vector<8x256xf32>
    %54 = arith.select %18, %52, %53 : vector<8x256xi1>, vector<8x256xf32>
    %cst_15 = arith.constant dense<0.000000e+00> : vector<8x256xf32>
    %55 = tpu.matmul %51, %24, %cst_15 {dimension_numbers = #tpu.dot_dimension_numbers<[1], [0], [0], [1], [0, 0, 1, 1], [], []>} : vector<8x64xf32>, vector<64x256xf32>, vector<8x256xf32> -> vector<8x256xf32>
    %56 = arith.addf %54, %55 : vector<8x256xf32>
    %57 = vector.extract_strided_slice %56 {offsets = [0, 0], sizes = [8, 192], strides = [1, 1]} : vector<8x256xf32> to vector<8x192xf32>
    %58 = arith.negf %57 : vector<8x192xf32>
    %59 = math.exp %58 : vector<8x192xf32>
    %cst_16 = arith.constant 1.000000e+00 : f32
    %60 = vector.broadcast %cst_16 : f32 to vector<8x192xf32>
    %61 = arith.addf %60, %59 : vector<8x192xf32>
    %62 = arith.divf %60, %61 : vector<8x192xf32>
    %63 = vector.extract_strided_slice %56 {offsets = [0, 192], sizes = [8, 64], strides = [1, 1]} : vector<8x256xf32> to vector<8x64xf32>
    %64 = math.tanh %63 : vector<8x64xf32>
    %65 = vector.extract_strided_slice %62 {offsets = [0, 0], sizes = [8, 64], strides = [1, 1]} : vector<8x192xf32> to vector<8x64xf32>
    %66 = vector.extract_strided_slice %62 {offsets = [0, 64], sizes = [8, 64], strides = [1, 1]} : vector<8x192xf32> to vector<8x64xf32>
    %67 = vector.extract_strided_slice %62 {offsets = [0, 128], sizes = [8, 64], strides = [1, 1]} : vector<8x192xf32> to vector<8x64xf32>
    %68 = arith.mulf %66, %49 : vector<8x64xf32>
    %69 = arith.mulf %65, %64 : vector<8x64xf32>
    %70 = arith.addf %68, %69 : vector<8x64xf32>
    %71 = math.tanh %70 : vector<8x64xf32>
    %72 = arith.mulf %67, %71 : vector<8x64xf32>
    %73 = vector.extract_strided_slice %28 {offsets = [16, 0], sizes = [8, 256], strides = [1, 1]} : vector<64x256xf32> to vector<8x256xf32>
    %74 = vector.extract_strided_slice %28 {offsets = [40, 0], sizes = [8, 256], strides = [1, 1]} : vector<64x256xf32> to vector<8x256xf32>
    %75 = arith.select %18, %73, %74 : vector<8x256xi1>, vector<8x256xf32>
    %cst_17 = arith.constant dense<0.000000e+00> : vector<8x256xf32>
    %76 = tpu.matmul %72, %24, %cst_17 {dimension_numbers = #tpu.dot_dimension_numbers<[1], [0], [0], [1], [0, 0, 1, 1], [], []>} : vector<8x64xf32>, vector<64x256xf32>, vector<8x256xf32> -> vector<8x256xf32>
    %77 = arith.addf %75, %76 : vector<8x256xf32>
    %78 = vector.extract_strided_slice %77 {offsets = [0, 0], sizes = [8, 192], strides = [1, 1]} : vector<8x256xf32> to vector<8x192xf32>
    %79 = arith.negf %78 : vector<8x192xf32>
    %80 = math.exp %79 : vector<8x192xf32>
    %cst_18 = arith.constant 1.000000e+00 : f32
    %81 = vector.broadcast %cst_18 : f32 to vector<8x192xf32>
    %82 = arith.addf %81, %80 : vector<8x192xf32>
    %83 = arith.divf %81, %82 : vector<8x192xf32>
    %84 = vector.extract_strided_slice %77 {offsets = [0, 192], sizes = [8, 64], strides = [1, 1]} : vector<8x256xf32> to vector<8x64xf32>
    %85 = math.tanh %84 : vector<8x64xf32>
    %86 = vector.extract_strided_slice %83 {offsets = [0, 0], sizes = [8, 64], strides = [1, 1]} : vector<8x192xf32> to vector<8x64xf32>
    %87 = vector.extract_strided_slice %83 {offsets = [0, 64], sizes = [8, 64], strides = [1, 1]} : vector<8x192xf32> to vector<8x64xf32>
    %88 = vector.extract_strided_slice %83 {offsets = [0, 128], sizes = [8, 64], strides = [1, 1]} : vector<8x192xf32> to vector<8x64xf32>
    %89 = arith.mulf %87, %70 : vector<8x64xf32>
    %90 = arith.mulf %86, %85 : vector<8x64xf32>
    %91 = arith.addf %89, %90 : vector<8x64xf32>
    %92 = math.tanh %91 : vector<8x64xf32>
    %93 = arith.mulf %88, %92 : vector<8x64xf32>
    %94 = vector.extract_strided_slice %28 {offsets = [24, 0], sizes = [8, 256], strides = [1, 1]} : vector<64x256xf32> to vector<8x256xf32>
    %95 = vector.extract_strided_slice %28 {offsets = [32, 0], sizes = [8, 256], strides = [1, 1]} : vector<64x256xf32> to vector<8x256xf32>
    %96 = arith.select %18, %94, %95 : vector<8x256xi1>, vector<8x256xf32>
    %cst_19 = arith.constant dense<0.000000e+00> : vector<8x256xf32>
    %97 = tpu.matmul %93, %24, %cst_19 {dimension_numbers = #tpu.dot_dimension_numbers<[1], [0], [0], [1], [0, 0, 1, 1], [], []>} : vector<8x64xf32>, vector<64x256xf32>, vector<8x256xf32> -> vector<8x256xf32>
    %98 = arith.addf %96, %97 : vector<8x256xf32>
    %99 = vector.extract_strided_slice %98 {offsets = [0, 0], sizes = [8, 192], strides = [1, 1]} : vector<8x256xf32> to vector<8x192xf32>
    %100 = arith.negf %99 : vector<8x192xf32>
    %101 = math.exp %100 : vector<8x192xf32>
    %cst_20 = arith.constant 1.000000e+00 : f32
    %102 = vector.broadcast %cst_20 : f32 to vector<8x192xf32>
    %103 = arith.addf %102, %101 : vector<8x192xf32>
    %104 = arith.divf %102, %103 : vector<8x192xf32>
    %105 = vector.extract_strided_slice %98 {offsets = [0, 192], sizes = [8, 64], strides = [1, 1]} : vector<8x256xf32> to vector<8x64xf32>
    %106 = math.tanh %105 : vector<8x64xf32>
    %107 = vector.extract_strided_slice %104 {offsets = [0, 0], sizes = [8, 64], strides = [1, 1]} : vector<8x192xf32> to vector<8x64xf32>
    %108 = vector.extract_strided_slice %104 {offsets = [0, 64], sizes = [8, 64], strides = [1, 1]} : vector<8x192xf32> to vector<8x64xf32>
    %109 = vector.extract_strided_slice %104 {offsets = [0, 128], sizes = [8, 64], strides = [1, 1]} : vector<8x192xf32> to vector<8x64xf32>
    %110 = arith.mulf %108, %91 : vector<8x64xf32>
    %111 = arith.mulf %107, %106 : vector<8x64xf32>
    %112 = arith.addf %110, %111 : vector<8x64xf32>
    %113 = math.tanh %112 : vector<8x64xf32>
    %114 = arith.mulf %109, %113 : vector<8x64xf32>
    %115 = vector.extract_strided_slice %28 {offsets = [32, 0], sizes = [8, 256], strides = [1, 1]} : vector<64x256xf32> to vector<8x256xf32>
    %116 = vector.extract_strided_slice %28 {offsets = [24, 0], sizes = [8, 256], strides = [1, 1]} : vector<64x256xf32> to vector<8x256xf32>
    %117 = arith.select %18, %115, %116 : vector<8x256xi1>, vector<8x256xf32>
    %cst_21 = arith.constant dense<0.000000e+00> : vector<8x256xf32>
    %118 = tpu.matmul %114, %24, %cst_21 {dimension_numbers = #tpu.dot_dimension_numbers<[1], [0], [0], [1], [0, 0, 1, 1], [], []>} : vector<8x64xf32>, vector<64x256xf32>, vector<8x256xf32> -> vector<8x256xf32>
    %119 = arith.addf %117, %118 : vector<8x256xf32>
    %120 = vector.extract_strided_slice %119 {offsets = [0, 0], sizes = [8, 192], strides = [1, 1]} : vector<8x256xf32> to vector<8x192xf32>
    %121 = arith.negf %120 : vector<8x192xf32>
    %122 = math.exp %121 : vector<8x192xf32>
    %cst_22 = arith.constant 1.000000e+00 : f32
    %123 = vector.broadcast %cst_22 : f32 to vector<8x192xf32>
    %124 = arith.addf %123, %122 : vector<8x192xf32>
    %125 = arith.divf %123, %124 : vector<8x192xf32>
    %126 = vector.extract_strided_slice %119 {offsets = [0, 192], sizes = [8, 64], strides = [1, 1]} : vector<8x256xf32> to vector<8x64xf32>
    %127 = math.tanh %126 : vector<8x64xf32>
    %128 = vector.extract_strided_slice %125 {offsets = [0, 0], sizes = [8, 64], strides = [1, 1]} : vector<8x192xf32> to vector<8x64xf32>
    %129 = vector.extract_strided_slice %125 {offsets = [0, 64], sizes = [8, 64], strides = [1, 1]} : vector<8x192xf32> to vector<8x64xf32>
    %130 = vector.extract_strided_slice %125 {offsets = [0, 128], sizes = [8, 64], strides = [1, 1]} : vector<8x192xf32> to vector<8x64xf32>
    %131 = arith.mulf %129, %112 : vector<8x64xf32>
    %132 = arith.mulf %128, %127 : vector<8x64xf32>
    %133 = arith.addf %131, %132 : vector<8x64xf32>
    %134 = math.tanh %133 : vector<8x64xf32>
    %135 = arith.mulf %130, %134 : vector<8x64xf32>
    %136 = vector.extract_strided_slice %28 {offsets = [40, 0], sizes = [8, 256], strides = [1, 1]} : vector<64x256xf32> to vector<8x256xf32>
    %137 = vector.extract_strided_slice %28 {offsets = [16, 0], sizes = [8, 256], strides = [1, 1]} : vector<64x256xf32> to vector<8x256xf32>
    %138 = arith.select %18, %136, %137 : vector<8x256xi1>, vector<8x256xf32>
    %cst_23 = arith.constant dense<0.000000e+00> : vector<8x256xf32>
    %139 = tpu.matmul %135, %24, %cst_23 {dimension_numbers = #tpu.dot_dimension_numbers<[1], [0], [0], [1], [0, 0, 1, 1], [], []>} : vector<8x64xf32>, vector<64x256xf32>, vector<8x256xf32> -> vector<8x256xf32>
    %140 = arith.addf %138, %139 : vector<8x256xf32>
    %141 = vector.extract_strided_slice %140 {offsets = [0, 0], sizes = [8, 192], strides = [1, 1]} : vector<8x256xf32> to vector<8x192xf32>
    %142 = arith.negf %141 : vector<8x192xf32>
    %143 = math.exp %142 : vector<8x192xf32>
    %cst_24 = arith.constant 1.000000e+00 : f32
    %144 = vector.broadcast %cst_24 : f32 to vector<8x192xf32>
    %145 = arith.addf %144, %143 : vector<8x192xf32>
    %146 = arith.divf %144, %145 : vector<8x192xf32>
    %147 = vector.extract_strided_slice %140 {offsets = [0, 192], sizes = [8, 64], strides = [1, 1]} : vector<8x256xf32> to vector<8x64xf32>
    %148 = math.tanh %147 : vector<8x64xf32>
    %149 = vector.extract_strided_slice %146 {offsets = [0, 0], sizes = [8, 64], strides = [1, 1]} : vector<8x192xf32> to vector<8x64xf32>
    %150 = vector.extract_strided_slice %146 {offsets = [0, 64], sizes = [8, 64], strides = [1, 1]} : vector<8x192xf32> to vector<8x64xf32>
    %151 = vector.extract_strided_slice %146 {offsets = [0, 128], sizes = [8, 64], strides = [1, 1]} : vector<8x192xf32> to vector<8x64xf32>
    %152 = arith.mulf %150, %133 : vector<8x64xf32>
    %153 = arith.mulf %149, %148 : vector<8x64xf32>
    %154 = arith.addf %152, %153 : vector<8x64xf32>
    %155 = math.tanh %154 : vector<8x64xf32>
    %156 = arith.mulf %151, %155 : vector<8x64xf32>
    %157 = vector.extract_strided_slice %28 {offsets = [48, 0], sizes = [8, 256], strides = [1, 1]} : vector<64x256xf32> to vector<8x256xf32>
    %158 = vector.extract_strided_slice %28 {offsets = [8, 0], sizes = [8, 256], strides = [1, 1]} : vector<64x256xf32> to vector<8x256xf32>
    %159 = arith.select %18, %157, %158 : vector<8x256xi1>, vector<8x256xf32>
    %cst_25 = arith.constant dense<0.000000e+00> : vector<8x256xf32>
    %160 = tpu.matmul %156, %24, %cst_25 {dimension_numbers = #tpu.dot_dimension_numbers<[1], [0], [0], [1], [0, 0, 1, 1], [], []>} : vector<8x64xf32>, vector<64x256xf32>, vector<8x256xf32> -> vector<8x256xf32>
    %161 = arith.addf %159, %160 : vector<8x256xf32>
    %162 = vector.extract_strided_slice %161 {offsets = [0, 0], sizes = [8, 192], strides = [1, 1]} : vector<8x256xf32> to vector<8x192xf32>
    %163 = arith.negf %162 : vector<8x192xf32>
    %164 = math.exp %163 : vector<8x192xf32>
    %cst_26 = arith.constant 1.000000e+00 : f32
    %165 = vector.broadcast %cst_26 : f32 to vector<8x192xf32>
    %166 = arith.addf %165, %164 : vector<8x192xf32>
    %167 = arith.divf %165, %166 : vector<8x192xf32>
    %168 = vector.extract_strided_slice %161 {offsets = [0, 192], sizes = [8, 64], strides = [1, 1]} : vector<8x256xf32> to vector<8x64xf32>
    %169 = math.tanh %168 : vector<8x64xf32>
    %170 = vector.extract_strided_slice %167 {offsets = [0, 0], sizes = [8, 64], strides = [1, 1]} : vector<8x192xf32> to vector<8x64xf32>
    %171 = vector.extract_strided_slice %167 {offsets = [0, 64], sizes = [8, 64], strides = [1, 1]} : vector<8x192xf32> to vector<8x64xf32>
    %172 = vector.extract_strided_slice %167 {offsets = [0, 128], sizes = [8, 64], strides = [1, 1]} : vector<8x192xf32> to vector<8x64xf32>
    %173 = arith.mulf %171, %154 : vector<8x64xf32>
    %174 = arith.mulf %170, %169 : vector<8x64xf32>
    %175 = arith.addf %173, %174 : vector<8x64xf32>
    %176 = math.tanh %175 : vector<8x64xf32>
    %177 = arith.mulf %172, %176 : vector<8x64xf32>
    %178 = vector.extract_strided_slice %28 {offsets = [56, 0], sizes = [8, 256], strides = [1, 1]} : vector<64x256xf32> to vector<8x256xf32>
    %179 = vector.extract_strided_slice %28 {offsets = [0, 0], sizes = [8, 256], strides = [1, 1]} : vector<64x256xf32> to vector<8x256xf32>
    %180 = arith.select %18, %178, %179 : vector<8x256xi1>, vector<8x256xf32>
    %cst_27 = arith.constant dense<0.000000e+00> : vector<8x256xf32>
    %181 = tpu.matmul %177, %24, %cst_27 {dimension_numbers = #tpu.dot_dimension_numbers<[1], [0], [0], [1], [0, 0, 1, 1], [], []>} : vector<8x64xf32>, vector<64x256xf32>, vector<8x256xf32> -> vector<8x256xf32>
    %182 = arith.addf %180, %181 : vector<8x256xf32>
    %183 = vector.extract_strided_slice %182 {offsets = [0, 0], sizes = [8, 192], strides = [1, 1]} : vector<8x256xf32> to vector<8x192xf32>
    %184 = arith.negf %183 : vector<8x192xf32>
    %185 = math.exp %184 : vector<8x192xf32>
    %cst_28 = arith.constant 1.000000e+00 : f32
    %186 = vector.broadcast %cst_28 : f32 to vector<8x192xf32>
    %187 = arith.addf %186, %185 : vector<8x192xf32>
    %188 = arith.divf %186, %187 : vector<8x192xf32>
    %189 = vector.extract_strided_slice %182 {offsets = [0, 192], sizes = [8, 64], strides = [1, 1]} : vector<8x256xf32> to vector<8x64xf32>
    %190 = math.tanh %189 : vector<8x64xf32>
    %191 = vector.extract_strided_slice %188 {offsets = [0, 0], sizes = [8, 64], strides = [1, 1]} : vector<8x192xf32> to vector<8x64xf32>
    %192 = vector.extract_strided_slice %188 {offsets = [0, 64], sizes = [8, 64], strides = [1, 1]} : vector<8x192xf32> to vector<8x64xf32>
    %193 = vector.extract_strided_slice %188 {offsets = [0, 128], sizes = [8, 64], strides = [1, 1]} : vector<8x192xf32> to vector<8x64xf32>
    %194 = arith.mulf %192, %175 : vector<8x64xf32>
    %195 = arith.mulf %191, %190 : vector<8x64xf32>
    %196 = arith.addf %194, %195 : vector<8x64xf32>
    %197 = math.tanh %196 : vector<8x64xf32>
    %198 = arith.mulf %193, %197 : vector<8x64xf32>
    %199 = arith.select %21, %51, %198 : vector<8x64xi1>, vector<8x64xf32>
    %200 = arith.select %21, %72, %177 : vector<8x64xi1>, vector<8x64xf32>
    %201 = arith.select %21, %93, %156 : vector<8x64xi1>, vector<8x64xf32>
    %202 = arith.select %21, %114, %135 : vector<8x64xi1>, vector<8x64xf32>
    %203 = arith.select %21, %135, %114 : vector<8x64xi1>, vector<8x64xf32>
    %204 = arith.select %21, %156, %93 : vector<8x64xi1>, vector<8x64xf32>
    %205 = arith.select %21, %177, %72 : vector<8x64xi1>, vector<8x64xf32>
    %206 = arith.select %21, %198, %51 : vector<8x64xi1>, vector<8x64xf32>
    %207 = tpu.concatenate %199, %200, %201, %202, %203, %204, %205, %206 in 0 : vector<8x64xf32>, vector<8x64xf32>, vector<8x64xf32>, vector<8x64xf32>, vector<8x64xf32>, vector<8x64xf32>, vector<8x64xf32>, vector<8x64xf32> -> vector<64x64xf32>
    %c0_29 = arith.constant 0 : index
    %c0_30 = arith.constant 0 : index
    %c0_31 = arith.constant 0 : index
    %208 = vector.load %arg10[%c0_29, %c0_30, %c0_31] : memref<2x8x64xf32, #tpu.memory_space<vmem>>, vector<1x8x64xf32>
    %209 = vector.shape_cast %208 : vector<1x8x64xf32> to vector<8x64xf32>
    %210 = vector.shape_cast %198 : vector<8x64xf32> to vector<1x8x64xf32>
    tpu.vector_store %arg10[%c0_29, %c0_30, %c0_31], %210 {strides = array<i32>} : memref<2x8x64xf32, #tpu.memory_space<vmem>>, vector<1x8x64xf32>,
    %c0_32 = arith.constant 0 : index
    %c0_33 = arith.constant 0 : index
    %c0_34 = arith.constant 0 : index
    %211 = vector.load %arg11[%c0_32, %c0_33, %c0_34] : memref<2x8x64xf32, #tpu.memory_space<vmem>>, vector<1x8x64xf32>
    %212 = vector.shape_cast %211 : vector<1x8x64xf32> to vector<8x64xf32>
    %213 = vector.shape_cast %196 : vector<8x64xf32> to vector<1x8x64xf32>
    tpu.vector_store %arg11[%c0_32, %c0_33, %c0_34], %213 {strides = array<i32>} : memref<2x8x64xf32, #tpu.memory_space<vmem>>, vector<1x8x64xf32>,
    %c0_35 = arith.constant 0 : index
    %c0_36 = arith.constant 0 : index
    %214 = vector.load %arg4[%c0_35, %c0_36] : memref<64x256xf32, #tpu.memory_space<vmem>>, vector<64x256xf32>
    %c0_37 = arith.constant 0 : index
    %c0_38 = arith.constant 0 : index
    %215 = vector.load %arg5[%c0_37, %c0_38] : memref<64x256xf32, #tpu.memory_space<vmem>>, vector<64x256xf32>
    %c0_39 = arith.constant 0 : index
    %c0_40 = arith.constant 0 : index
    %216 = vector.load %arg6[%c0_39, %c0_40] : memref<1x256xf32, #tpu.memory_space<vmem>>, vector<1x256xf32>
    %cst_41 = arith.constant dense<0.000000e+00> : vector<64x256xf32>
    %217 = tpu.matmul %207, %214, %cst_41 {dimension_numbers = #tpu.dot_dimension_numbers<[1], [0], [0], [1], [0, 0, 1, 1], [], []>} : vector<64x64xf32>, vector<64x256xf32>, vector<64x256xf32> -> vector<64x256xf32>
    %218 = vector.broadcast %216 : vector<1x256xf32> to vector<64x256xf32>
    %219 = arith.addf %217, %218 : vector<64x256xf32>
    %cst_42 = arith.constant 0.000000e+00 : f32
    %220 = vector.broadcast %cst_42 : f32 to vector<8x64xf32>
    %cst_43 = arith.constant 0.000000e+00 : f32
    %221 = vector.broadcast %cst_43 : f32 to vector<8x64xf32>
    %cst_44 = arith.constant 0.000000e+00 : f32
    %222 = vector.broadcast %cst_44 : f32 to vector<8x64xf32>
    %223 = vector.extract_strided_slice %219 {offsets = [0, 0], sizes = [8, 256], strides = [1, 1]} : vector<64x256xf32> to vector<8x256xf32>
    %224 = vector.extract_strided_slice %219 {offsets = [56, 0], sizes = [8, 256], strides = [1, 1]} : vector<64x256xf32> to vector<8x256xf32>
    %225 = arith.select %18, %223, %224 : vector<8x256xi1>, vector<8x256xf32>
    %cst_45 = arith.constant dense<0.000000e+00> : vector<8x256xf32>
    %226 = tpu.matmul %220, %215, %cst_45 {dimension_numbers = #tpu.dot_dimension_numbers<[1], [0], [0], [1], [0, 0, 1, 1], [], []>} : vector<8x64xf32>, vector<64x256xf32>, vector<8x256xf32> -> vector<8x256xf32>
    %227 = arith.addf %225, %226 : vector<8x256xf32>
    %228 = vector.extract_strided_slice %227 {offsets = [0, 0], sizes = [8, 192], strides = [1, 1]} : vector<8x256xf32> to vector<8x192xf32>
    %229 = arith.negf %228 : vector<8x192xf32>
    %230 = math.exp %229 : vector<8x192xf32>
    %cst_46 = arith.constant 1.000000e+00 : f32
    %231 = vector.broadcast %cst_46 : f32 to vector<8x192xf32>
    %232 = arith.addf %231, %230 : vector<8x192xf32>
    %233 = arith.divf %231, %232 : vector<8x192xf32>
    %234 = vector.extract_strided_slice %227 {offsets = [0, 192], sizes = [8, 64], strides = [1, 1]} : vector<8x256xf32> to vector<8x64xf32>
    %235 = math.tanh %234 : vector<8x64xf32>
    %236 = vector.extract_strided_slice %233 {offsets = [0, 0], sizes = [8, 64], strides = [1, 1]} : vector<8x192xf32> to vector<8x64xf32>
    %237 = vector.extract_strided_slice %233 {offsets = [0, 64], sizes = [8, 64], strides = [1, 1]} : vector<8x192xf32> to vector<8x64xf32>
    %238 = vector.extract_strided_slice %233 {offsets = [0, 128], sizes = [8, 64], strides = [1, 1]} : vector<8x192xf32> to vector<8x64xf32>
    %239 = arith.mulf %237, %221 : vector<8x64xf32>
    %240 = arith.mulf %236, %235 : vector<8x64xf32>
    %241 = arith.addf %239, %240 : vector<8x64xf32>
    %242 = math.tanh %241 : vector<8x64xf32>
    %243 = arith.mulf %238, %242 : vector<8x64xf32>
    %244 = arith.addf %222, %243 : vector<8x64xf32>
    %245 = vector.extract_strided_slice %219 {offsets = [8, 0], sizes = [8, 256], strides = [1, 1]} : vector<64x256xf32> to vector<8x256xf32>
    %246 = vector.extract_strided_slice %219 {offsets = [48, 0], sizes = [8, 256], strides = [1, 1]} : vector<64x256xf32> to vector<8x256xf32>
    %247 = arith.select %18, %245, %246 : vector<8x256xi1>, vector<8x256xf32>
    %cst_47 = arith.constant dense<0.000000e+00> : vector<8x256xf32>
    %248 = tpu.matmul %243, %215, %cst_47 {dimension_numbers = #tpu.dot_dimension_numbers<[1], [0], [0], [1], [0, 0, 1, 1], [], []>} : vector<8x64xf32>, vector<64x256xf32>, vector<8x256xf32> -> vector<8x256xf32>
    %249 = arith.addf %247, %248 : vector<8x256xf32>
    %250 = vector.extract_strided_slice %249 {offsets = [0, 0], sizes = [8, 192], strides = [1, 1]} : vector<8x256xf32> to vector<8x192xf32>
    %251 = arith.negf %250 : vector<8x192xf32>
    %252 = math.exp %251 : vector<8x192xf32>
    %cst_48 = arith.constant 1.000000e+00 : f32
    %253 = vector.broadcast %cst_48 : f32 to vector<8x192xf32>
    %254 = arith.addf %253, %252 : vector<8x192xf32>
    %255 = arith.divf %253, %254 : vector<8x192xf32>
    %256 = vector.extract_strided_slice %249 {offsets = [0, 192], sizes = [8, 64], strides = [1, 1]} : vector<8x256xf32> to vector<8x64xf32>
    %257 = math.tanh %256 : vector<8x64xf32>
    %258 = vector.extract_strided_slice %255 {offsets = [0, 0], sizes = [8, 64], strides = [1, 1]} : vector<8x192xf32> to vector<8x64xf32>
    %259 = vector.extract_strided_slice %255 {offsets = [0, 64], sizes = [8, 64], strides = [1, 1]} : vector<8x192xf32> to vector<8x64xf32>
    %260 = vector.extract_strided_slice %255 {offsets = [0, 128], sizes = [8, 64], strides = [1, 1]} : vector<8x192xf32> to vector<8x64xf32>
    %261 = arith.mulf %259, %241 : vector<8x64xf32>
    %262 = arith.mulf %258, %257 : vector<8x64xf32>
    %263 = arith.addf %261, %262 : vector<8x64xf32>
    %264 = math.tanh %263 : vector<8x64xf32>
    %265 = arith.mulf %260, %264 : vector<8x64xf32>
    %266 = arith.addf %244, %265 : vector<8x64xf32>
    %267 = vector.extract_strided_slice %219 {offsets = [16, 0], sizes = [8, 256], strides = [1, 1]} : vector<64x256xf32> to vector<8x256xf32>
    %268 = vector.extract_strided_slice %219 {offsets = [40, 0], sizes = [8, 256], strides = [1, 1]} : vector<64x256xf32> to vector<8x256xf32>
    %269 = arith.select %18, %267, %268 : vector<8x256xi1>, vector<8x256xf32>
    %cst_49 = arith.constant dense<0.000000e+00> : vector<8x256xf32>
    %270 = tpu.matmul %265, %215, %cst_49 {dimension_numbers = #tpu.dot_dimension_numbers<[1], [0], [0], [1], [0, 0, 1, 1], [], []>} : vector<8x64xf32>, vector<64x256xf32>, vector<8x256xf32> -> vector<8x256xf32>
    %271 = arith.addf %269, %270 : vector<8x256xf32>
    %272 = vector.extract_strided_slice %271 {offsets = [0, 0], sizes = [8, 192], strides = [1, 1]} : vector<8x256xf32> to vector<8x192xf32>
    %273 = arith.negf %272 : vector<8x192xf32>
    %274 = math.exp %273 : vector<8x192xf32>
    %cst_50 = arith.constant 1.000000e+00 : f32
    %275 = vector.broadcast %cst_50 : f32 to vector<8x192xf32>
    %276 = arith.addf %275, %274 : vector<8x192xf32>
    %277 = arith.divf %275, %276 : vector<8x192xf32>
    %278 = vector.extract_strided_slice %271 {offsets = [0, 192], sizes = [8, 64], strides = [1, 1]} : vector<8x256xf32> to vector<8x64xf32>
    %279 = math.tanh %278 : vector<8x64xf32>
    %280 = vector.extract_strided_slice %277 {offsets = [0, 0], sizes = [8, 64], strides = [1, 1]} : vector<8x192xf32> to vector<8x64xf32>
    %281 = vector.extract_strided_slice %277 {offsets = [0, 64], sizes = [8, 64], strides = [1, 1]} : vector<8x192xf32> to vector<8x64xf32>
    %282 = vector.extract_strided_slice %277 {offsets = [0, 128], sizes = [8, 64], strides = [1, 1]} : vector<8x192xf32> to vector<8x64xf32>
    %283 = arith.mulf %281, %263 : vector<8x64xf32>
    %284 = arith.mulf %280, %279 : vector<8x64xf32>
    %285 = arith.addf %283, %284 : vector<8x64xf32>
    %286 = math.tanh %285 : vector<8x64xf32>
    %287 = arith.mulf %282, %286 : vector<8x64xf32>
    %288 = arith.addf %266, %287 : vector<8x64xf32>
    %289 = vector.extract_strided_slice %219 {offsets = [24, 0], sizes = [8, 256], strides = [1, 1]} : vector<64x256xf32> to vector<8x256xf32>
    %290 = vector.extract_strided_slice %219 {offsets = [32, 0], sizes = [8, 256], strides = [1, 1]} : vector<64x256xf32> to vector<8x256xf32>
    %291 = arith.select %18, %289, %290 : vector<8x256xi1>, vector<8x256xf32>
    %cst_51 = arith.constant dense<0.000000e+00> : vector<8x256xf32>
    %292 = tpu.matmul %287, %215, %cst_51 {dimension_numbers = #tpu.dot_dimension_numbers<[1], [0], [0], [1], [0, 0, 1, 1], [], []>} : vector<8x64xf32>, vector<64x256xf32>, vector<8x256xf32> -> vector<8x256xf32>
    %293 = arith.addf %291, %292 : vector<8x256xf32>
    %294 = vector.extract_strided_slice %293 {offsets = [0, 0], sizes = [8, 192], strides = [1, 1]} : vector<8x256xf32> to vector<8x192xf32>
    %295 = arith.negf %294 : vector<8x192xf32>
    %296 = math.exp %295 : vector<8x192xf32>
    %cst_52 = arith.constant 1.000000e+00 : f32
    %297 = vector.broadcast %cst_52 : f32 to vector<8x192xf32>
    %298 = arith.addf %297, %296 : vector<8x192xf32>
    %299 = arith.divf %297, %298 : vector<8x192xf32>
    %300 = vector.extract_strided_slice %293 {offsets = [0, 192], sizes = [8, 64], strides = [1, 1]} : vector<8x256xf32> to vector<8x64xf32>
    %301 = math.tanh %300 : vector<8x64xf32>
    %302 = vector.extract_strided_slice %299 {offsets = [0, 0], sizes = [8, 64], strides = [1, 1]} : vector<8x192xf32> to vector<8x64xf32>
    %303 = vector.extract_strided_slice %299 {offsets = [0, 64], sizes = [8, 64], strides = [1, 1]} : vector<8x192xf32> to vector<8x64xf32>
    %304 = vector.extract_strided_slice %299 {offsets = [0, 128], sizes = [8, 64], strides = [1, 1]} : vector<8x192xf32> to vector<8x64xf32>
    %305 = arith.mulf %303, %285 : vector<8x64xf32>
    %306 = arith.mulf %302, %301 : vector<8x64xf32>
    %307 = arith.addf %305, %306 : vector<8x64xf32>
    %308 = math.tanh %307 : vector<8x64xf32>
    %309 = arith.mulf %304, %308 : vector<8x64xf32>
    %310 = arith.addf %288, %309 : vector<8x64xf32>
    %311 = vector.extract_strided_slice %219 {offsets = [32, 0], sizes = [8, 256], strides = [1, 1]} : vector<64x256xf32> to vector<8x256xf32>
    %312 = vector.extract_strided_slice %219 {offsets = [24, 0], sizes = [8, 256], strides = [1, 1]} : vector<64x256xf32> to vector<8x256xf32>
    %313 = arith.select %18, %311, %312 : vector<8x256xi1>, vector<8x256xf32>
    %cst_53 = arith.constant dense<0.000000e+00> : vector<8x256xf32>
    %314 = tpu.matmul %309, %215, %cst_53 {dimension_numbers = #tpu.dot_dimension_numbers<[1], [0], [0], [1], [0, 0, 1, 1], [], []>} : vector<8x64xf32>, vector<64x256xf32>, vector<8x256xf32> -> vector<8x256xf32>
    %315 = arith.addf %313, %314 : vector<8x256xf32>
    %316 = vector.extract_strided_slice %315 {offsets = [0, 0], sizes = [8, 192], strides = [1, 1]} : vector<8x256xf32> to vector<8x192xf32>
    %317 = arith.negf %316 : vector<8x192xf32>
    %318 = math.exp %317 : vector<8x192xf32>
    %cst_54 = arith.constant 1.000000e+00 : f32
    %319 = vector.broadcast %cst_54 : f32 to vector<8x192xf32>
    %320 = arith.addf %319, %318 : vector<8x192xf32>
    %321 = arith.divf %319, %320 : vector<8x192xf32>
    %322 = vector.extract_strided_slice %315 {offsets = [0, 192], sizes = [8, 64], strides = [1, 1]} : vector<8x256xf32> to vector<8x64xf32>
    %323 = math.tanh %322 : vector<8x64xf32>
    %324 = vector.extract_strided_slice %321 {offsets = [0, 0], sizes = [8, 64], strides = [1, 1]} : vector<8x192xf32> to vector<8x64xf32>
    %325 = vector.extract_strided_slice %321 {offsets = [0, 64], sizes = [8, 64], strides = [1, 1]} : vector<8x192xf32> to vector<8x64xf32>
    %326 = vector.extract_strided_slice %321 {offsets = [0, 128], sizes = [8, 64], strides = [1, 1]} : vector<8x192xf32> to vector<8x64xf32>
    %327 = arith.mulf %325, %307 : vector<8x64xf32>
    %328 = arith.mulf %324, %323 : vector<8x64xf32>
    %329 = arith.addf %327, %328 : vector<8x64xf32>
    %330 = math.tanh %329 : vector<8x64xf32>
    %331 = arith.mulf %326, %330 : vector<8x64xf32>
    %332 = arith.addf %310, %331 : vector<8x64xf32>
    %333 = vector.extract_strided_slice %219 {offsets = [40, 0], sizes = [8, 256], strides = [1, 1]} : vector<64x256xf32> to vector<8x256xf32>
    %334 = vector.extract_strided_slice %219 {offsets = [16, 0], sizes = [8, 256], strides = [1, 1]} : vector<64x256xf32> to vector<8x256xf32>
    %335 = arith.select %18, %333, %334 : vector<8x256xi1>, vector<8x256xf32>
    %cst_55 = arith.constant dense<0.000000e+00> : vector<8x256xf32>
    %336 = tpu.matmul %331, %215, %cst_55 {dimension_numbers = #tpu.dot_dimension_numbers<[1], [0], [0], [1], [0, 0, 1, 1], [], []>} : vector<8x64xf32>, vector<64x256xf32>, vector<8x256xf32> -> vector<8x256xf32>
    %337 = arith.addf %335, %336 : vector<8x256xf32>
    %338 = vector.extract_strided_slice %337 {offsets = [0, 0], sizes = [8, 192], strides = [1, 1]} : vector<8x256xf32> to vector<8x192xf32>
    %339 = arith.negf %338 : vector<8x192xf32>
    %340 = math.exp %339 : vector<8x192xf32>
    %cst_56 = arith.constant 1.000000e+00 : f32
    %341 = vector.broadcast %cst_56 : f32 to vector<8x192xf32>
    %342 = arith.addf %341, %340 : vector<8x192xf32>
    %343 = arith.divf %341, %342 : vector<8x192xf32>
    %344 = vector.extract_strided_slice %337 {offsets = [0, 192], sizes = [8, 64], strides = [1, 1]} : vector<8x256xf32> to vector<8x64xf32>
    %345 = math.tanh %344 : vector<8x64xf32>
    %346 = vector.extract_strided_slice %343 {offsets = [0, 0], sizes = [8, 64], strides = [1, 1]} : vector<8x192xf32> to vector<8x64xf32>
    %347 = vector.extract_strided_slice %343 {offsets = [0, 64], sizes = [8, 64], strides = [1, 1]} : vector<8x192xf32> to vector<8x64xf32>
    %348 = vector.extract_strided_slice %343 {offsets = [0, 128], sizes = [8, 64], strides = [1, 1]} : vector<8x192xf32> to vector<8x64xf32>
    %349 = arith.mulf %347, %329 : vector<8x64xf32>
    %350 = arith.mulf %346, %345 : vector<8x64xf32>
    %351 = arith.addf %349, %350 : vector<8x64xf32>
    %352 = math.tanh %351 : vector<8x64xf32>
    %353 = arith.mulf %348, %352 : vector<8x64xf32>
    %354 = arith.addf %332, %353 : vector<8x64xf32>
    %355 = vector.extract_strided_slice %219 {offsets = [48, 0], sizes = [8, 256], strides = [1, 1]} : vector<64x256xf32> to vector<8x256xf32>
    %356 = vector.extract_strided_slice %219 {offsets = [8, 0], sizes = [8, 256], strides = [1, 1]} : vector<64x256xf32> to vector<8x256xf32>
    %357 = arith.select %18, %355, %356 : vector<8x256xi1>, vector<8x256xf32>
    %cst_57 = arith.constant dense<0.000000e+00> : vector<8x256xf32>
    %358 = tpu.matmul %353, %215, %cst_57 {dimension_numbers = #tpu.dot_dimension_numbers<[1], [0], [0], [1], [0, 0, 1, 1], [], []>} : vector<8x64xf32>, vector<64x256xf32>, vector<8x256xf32> -> vector<8x256xf32>
    %359 = arith.addf %357, %358 : vector<8x256xf32>
    %360 = vector.extract_strided_slice %359 {offsets = [0, 0], sizes = [8, 192], strides = [1, 1]} : vector<8x256xf32> to vector<8x192xf32>
    %361 = arith.negf %360 : vector<8x192xf32>
    %362 = math.exp %361 : vector<8x192xf32>
    %cst_58 = arith.constant 1.000000e+00 : f32
    %363 = vector.broadcast %cst_58 : f32 to vector<8x192xf32>
    %364 = arith.addf %363, %362 : vector<8x192xf32>
    %365 = arith.divf %363, %364 : vector<8x192xf32>
    %366 = vector.extract_strided_slice %359 {offsets = [0, 192], sizes = [8, 64], strides = [1, 1]} : vector<8x256xf32> to vector<8x64xf32>
    %367 = math.tanh %366 : vector<8x64xf32>
    %368 = vector.extract_strided_slice %365 {offsets = [0, 0], sizes = [8, 64], strides = [1, 1]} : vector<8x192xf32> to vector<8x64xf32>
    %369 = vector.extract_strided_slice %365 {offsets = [0, 64], sizes = [8, 64], strides = [1, 1]} : vector<8x192xf32> to vector<8x64xf32>
    %370 = vector.extract_strided_slice %365 {offsets = [0, 128], sizes = [8, 64], strides = [1, 1]} : vector<8x192xf32> to vector<8x64xf32>
    %371 = arith.mulf %369, %351 : vector<8x64xf32>
    %372 = arith.mulf %368, %367 : vector<8x64xf32>
    %373 = arith.addf %371, %372 : vector<8x64xf32>
    %374 = math.tanh %373 : vector<8x64xf32>
    %375 = arith.mulf %370, %374 : vector<8x64xf32>
    %376 = arith.addf %354, %375 : vector<8x64xf32>
    %377 = vector.extract_strided_slice %219 {offsets = [56, 0], sizes = [8, 256], strides = [1, 1]} : vector<64x256xf32> to vector<8x256xf32>
    %378 = vector.extract_strided_slice %219 {offsets = [0, 0], sizes = [8, 256], strides = [1, 1]} : vector<64x256xf32> to vector<8x256xf32>
    %379 = arith.select %18, %377, %378 : vector<8x256xi1>, vector<8x256xf32>
    %cst_59 = arith.constant dense<0.000000e+00> : vector<8x256xf32>
    %380 = tpu.matmul %375, %215, %cst_59 {dimension_numbers = #tpu.dot_dimension_numbers<[1], [0], [0], [1], [0, 0, 1, 1], [], []>} : vector<8x64xf32>, vector<64x256xf32>, vector<8x256xf32> -> vector<8x256xf32>
    %381 = arith.addf %379, %380 : vector<8x256xf32>
    %382 = vector.extract_strided_slice %381 {offsets = [0, 0], sizes = [8, 192], strides = [1, 1]} : vector<8x256xf32> to vector<8x192xf32>
    %383 = arith.negf %382 : vector<8x192xf32>
    %384 = math.exp %383 : vector<8x192xf32>
    %cst_60 = arith.constant 1.000000e+00 : f32
    %385 = vector.broadcast %cst_60 : f32 to vector<8x192xf32>
    %386 = arith.addf %385, %384 : vector<8x192xf32>
    %387 = arith.divf %385, %386 : vector<8x192xf32>
    %388 = vector.extract_strided_slice %381 {offsets = [0, 192], sizes = [8, 64], strides = [1, 1]} : vector<8x256xf32> to vector<8x64xf32>
    %389 = math.tanh %388 : vector<8x64xf32>
    %390 = vector.extract_strided_slice %387 {offsets = [0, 0], sizes = [8, 64], strides = [1, 1]} : vector<8x192xf32> to vector<8x64xf32>
    %391 = vector.extract_strided_slice %387 {offsets = [0, 64], sizes = [8, 64], strides = [1, 1]} : vector<8x192xf32> to vector<8x64xf32>
    %392 = vector.extract_strided_slice %387 {offsets = [0, 128], sizes = [8, 64], strides = [1, 1]} : vector<8x192xf32> to vector<8x64xf32>
    %393 = arith.mulf %391, %373 : vector<8x64xf32>
    %394 = arith.mulf %390, %389 : vector<8x64xf32>
    %395 = arith.addf %393, %394 : vector<8x64xf32>
    %396 = math.tanh %395 : vector<8x64xf32>
    %397 = arith.mulf %392, %396 : vector<8x64xf32>
    %398 = arith.addf %376, %397 : vector<8x64xf32>
    %cst_61 = arith.constant 0.000000e+00 : f32
    %399 = vector.broadcast %cst_61 : f32 to vector<8x64xf32>
    %400 = arith.maximumf %398, %399 : vector<8x64xf32>
    %c0_62 = arith.constant 0 : index
    %c0_63 = arith.constant 0 : index
    %401 = vector.load %arg7[%c0_62, %c0_63] : memref<64x13xf32, #tpu.memory_space<vmem>>, vector<64x13xf32>
    %cst_64 = arith.constant dense<0.000000e+00> : vector<8x13xf32>
    %402 = tpu.matmul %400, %401, %cst_64 {dimension_numbers = #tpu.dot_dimension_numbers<[1], [0], [0], [1], [0, 0, 1, 1], [], []>} : vector<8x64xf32>, vector<64x13xf32>, vector<8x13xf32> -> vector<8x13xf32>
    %c0_65 = arith.constant 0 : index
    %c0_66 = arith.constant 0 : index
    %403 = vector.load %arg8[%c0_65, %c0_66] : memref<1x13xf32, #tpu.memory_space<vmem>>, vector<1x13xf32>
    %404 = vector.broadcast %403 : vector<1x13xf32> to vector<8x13xf32>
    %405 = arith.addf %402, %404 : vector<8x13xf32>
    %c0_67 = arith.constant 0 : index
    %c0_68 = arith.constant 0 : index
    %406 = vector.load %arg9[%c0_67, %c0_68] : memref<8x13xf32, #tpu.memory_space<vmem>>, vector<8x13xf32>
    tpu.vector_store %arg9[%c0_67, %c0_68], %405 {strides = array<i32>} : memref<8x13xf32, #tpu.memory_space<vmem>>, vector<8x13xf32>,
    %c1 = arith.constant 1 : index
    %c0_69 = arith.constant 0 : index
    %c0_70 = arith.constant 0 : index
    %407 = vector.load %arg10[%c1, %c0_69, %c0_70] : memref<2x8x64xf32, #tpu.memory_space<vmem>>, vector<1x8x64xf32>
    %408 = vector.shape_cast %407 : vector<1x8x64xf32> to vector<8x64xf32>
    %409 = vector.shape_cast %397 : vector<8x64xf32> to vector<1x8x64xf32>
    tpu.vector_store %arg10[%c1, %c0_69, %c0_70], %409 {strides = array<i32>} : memref<2x8x64xf32, #tpu.memory_space<vmem>>, vector<1x8x64xf32>,
    %c1_71 = arith.constant 1 : index
    %c0_72 = arith.constant 0 : index
    %c0_73 = arith.constant 0 : index
    %410 = vector.load %arg11[%c1_71, %c0_72, %c0_73] : memref<2x8x64xf32, #tpu.memory_space<vmem>>, vector<1x8x64xf32>
    %411 = vector.shape_cast %410 : vector<1x8x64xf32> to vector<8x64xf32>
    %412 = vector.shape_cast %395 : vector<8x64xf32> to vector<1x8x64xf32>
    tpu.vector_store %arg11[%c1_71, %c0_72, %c0_73], %412 {strides = array<i32>} : memref<2x8x64xf32, #tpu.memory_space<vmem>>, vector<1x8x64xf32>,
    return
  }
}

</mosaic_0001>

<llo_original>
// kernel: tpu_custom_call.1
$region0: #{tpu_custom_call.1}
  #allocation0 [shape = 'u32[]', space=smem, size = 0x4, offset = 0x4, fixed_abs, tag = 'smem constant byte address 0x4 - core index']
  #allocation1 [shape = 'u32[72,128]{1,0:T(1,128)}', space=vmem, size = 0x9000, scoped, tag = 'internal scratch']
  %s0 = inlined_call_operand.vmem [shape: f32[64,16], index: 0, kind: input, shape index: {}]
  %s1 = inlined_call_operand.hbm [shape: f32[16,256], index: 1, kind: input, shape index: {}]
  %s2 = inlined_call_operand.vmem [shape: f32[64,256], index: 2, kind: input, shape index: {}]
  %s3 = inlined_call_operand.vmem [shape: f32[1,256], index: 3, kind: input, shape index: {}]
  %s4 = inlined_call_operand.hbm [shape: f32[64,256], index: 4, kind: input, shape index: {}]
  %s5 = inlined_call_operand.hbm [shape: f32[64,256], index: 5, kind: input, shape index: {}]
  %s6 = inlined_call_operand.vmem [shape: f32[1,256], index: 6, kind: input, shape index: {}]
  %s7 = inlined_call_operand.vmem [shape: f32[64,13], index: 7, kind: input, shape index: {}]
  %s8 = inlined_call_operand.vmem [shape: f32[1,13], index: 8, kind: input, shape index: {}]
  %s9 = inlined_call_operand.hbm [shape: f32[8,13], index: 9, kind: output, shape index: {0}]
  %s10 = inlined_call_operand.hbm [shape: f32[2,8,64], index: 10, kind: output, shape index: {1}]
  %s11 = inlined_call_operand.hbm [shape: f32[2,8,64], index: 11, kind: output, shape index: {2}]
  %12 = xla_tuple %s9, %s10, %s11
  %s13 = sld [smem:[#allocation0]]
  $region74: #{tpu_custom_call.1} parent=0
    _
  %s15 = ssub.s32 1, %s13
  %s16 = scalar_select 0, %s15, %s13
  $region1: #{tpu_custom_call.1} parent=0
    #allocation2 [shape = 'u8[16384]{0}', space=vmem, size = 0x4000, scoped, tag = 'input window, operand 1, single buffered']
    #allocation3 [shape = 's32[1]{0}', space=sflag, size = 0x4, scoped, tag = 'scoped memory for tpu_custom_call.1']
    #allocation4 [shape = 's32[1]{0}', space=sflag, size = 0x4, scoped, tag = 'scoped memory for tpu_custom_call.1']
    #allocation5 [shape = 'u8[65536]{0}', space=vmem, size = 0x10000, scoped, tag = 'input window, operand 4, single buffered']
    #allocation6 [shape = 's32[1]{0}', space=sflag, size = 0x4, scoped, tag = 'scoped memory for tpu_custom_call.1']
    #allocation7 [shape = 'u8[65536]{0}', space=vmem, size = 0x10000, scoped, tag = 'input window, operand 5, single buffered']
    #allocation8 [shape = 'u8[4096]{0}', space=vmem, size = 0x1000, scoped, tag = 'output window, operand 0, single buffered']
    #allocation9 [shape = 'u8[8192]{0}', space=vmem, size = 0x2000, scoped, tag = 'output window, operand 1, single buffered']
    #allocation10 [shape = 's32[1]{0}', space=sflag, size = 0x4, scoped, tag = 'scoped memory for tpu_custom_call.1']
    #allocation11 [shape = 'u8[8192]{0}', space=vmem, size = 0x2000, scoped, tag = 'output window, operand 2, single buffered']
    %17 = vsyncpa [#allocation3], 0
    %18 = vsyncpa [#allocation6], 0
    %19 = vsyncpa [#allocation4], 0
    %20 = vsyncpa [#allocation10], 0
    // Predicated region
    $region2: #{tpu_custom_call.1} parent=1 // pred_check
      _
    $region3: #{tpu_custom_call.1} parent=1 // pred_check_branch
      %22 = sbr.rel (0) target = $region5
    $region4: #{tpu_custom_call.1} parent=1 // pred_region
      _
    $region5: #{tpu_custom_call.1} parent=1 // pred_fallthru
      _
    // Predicated region
    $region6: #{tpu_custom_call.1} parent=1 // pred_check
      _
    $region7: #{tpu_custom_call.1} parent=1 // pred_check_branch
      %24 = sbr.rel (0) target = $region9
    $region8: #{tpu_custom_call.1} parent=1 // pred_region
      %26 = vsyncadd [#allocation3], 0
      %s27 = sshll.u32 %s1, 4
      %s28 = int_to_ptr.hbm [resolvable:$true] %s27
      %s29 = sshll.u32 [#allocation2], 4
      %s30 = int_to_ptr.vmem [resolvable:$true] %s29
      %35 = dma.hbm_to_vmem [thread:$0]  %s28, 512, %s30, [#allocation3], 256, 256, 16
    $region9: #{tpu_custom_call.1} parent=1 // pred_fallthru
      _
    // Predicated region
    $region10: #{tpu_custom_call.1} parent=1 // pred_check
      _
    $region11: #{tpu_custom_call.1} parent=1 // pred_check_branch
      %37 = sbr.rel (0) target = $region13
    $region12: #{tpu_custom_call.1} parent=1 // pred_region
      _
    $region13: #{tpu_custom_call.1} parent=1 // pred_fallthru
      _
    // Predicated region
    $region14: #{tpu_custom_call.1} parent=1 // pred_check
      _
    $region15: #{tpu_custom_call.1} parent=1 // pred_check_branch
      %39 = sbr.rel (0) target = $region17
    $region16: #{tpu_custom_call.1} parent=1 // pred_region
      _
    $region17: #{tpu_custom_call.1} parent=1 // pred_fallthru
      _
    // Predicated region
    $region18: #{tpu_custom_call.1} parent=1 // pred_check
      _
    $region19: #{tpu_custom_call.1} parent=1 // pred_check_branch
      %41 = sbr.rel (0) target = $region21
    $region20: #{tpu_custom_call.1} parent=1 // pred_region
      %43 = vsyncadd [#allocation6], 0
      %s44 = sshll.u32 %s4, 4
      %s45 = int_to_ptr.hbm [resolvable:$true] %s44
      %s46 = sshll.u32 [#allocation5], 4
      %s47 = int_to_ptr.vmem [resolvable:$true] %s46
      %52 = dma.hbm_to_vmem [thread:$0]  %s45, 2048, %s47, [#allocation6], 256, 256, 16
    $region21: #{tpu_custom_call.1} parent=1 // pred_fallthru
      _
    // Predicated region
    $region22: #{tpu_custom_call.1} parent=1 // pred_check
      _
    $region23: #{tpu_custom_call.1} parent=1 // pred_check_branch
      %54 = sbr.rel (0) target = $region25
    $region24: #{tpu_custom_call.1} parent=1 // pred_region
      %56 = vsyncadd [#allocation6], 0
      %s57 = sshll.u32 %s5, 4
      %s58 = int_to_ptr.hbm [resolvable:$true] %s57
      %s59 = sshll.u32 [#allocation7], 4
      %s60 = int_to_ptr.vmem [resolvable:$true] %s59
      %65 = dma.hbm_to_vmem [thread:$0]  %s58, 2048, %s60, [#allocation6], 256, 256, 16
    $region25: #{tpu_custom_call.1} parent=1 // pred_fallthru
      _
    // Predicated region
    $region26: #{tpu_custom_call.1} parent=1 // pred_check
      _
    $region27: #{tpu_custom_call.1} parent=1 // pred_check_branch
      %67 = sbr.rel (0) target = $region29
    $region28: #{tpu_custom_call.1} parent=1 // pred_region
      _
    $region29: #{tpu_custom_call.1} parent=1 // pred_fallthru
      _
    // Predicated region
    $region30: #{tpu_custom_call.1} parent=1 // pred_check
      _
    $region31: #{tpu_custom_call.1} parent=1 // pred_check_branch
      %69 = sbr.rel (0) target = $region33
    $region32: #{tpu_custom_call.1} parent=1 // pred_region
      _
    $region33: #{tpu_custom_call.1} parent=1 // pred_fallthru
      _
    // Predicated region
    $region34: #{tpu_custom_call.1} parent=1 // pred_check
      _
    $region35: #{tpu_custom_call.1} parent=1 // pred_check_branch
      %71 = sbr.rel (0) target = $region37
    $region36: #{tpu_custom_call.1} parent=1 // pred_region
      _
    $region37: #{tpu_custom_call.1} parent=1 // pred_fallthru
      _
    // Predicated region
    $region38: #{tpu_custom_call.1} parent=1 // pred_check
      _
    $region39: #{tpu_custom_call.1} parent=1 // pred_check_branch
      %73 = sbr.rel (0) target = $region41
    $region40: #{tpu_custom_call.1} parent=1 // pred_region
      %75 = dma.done [#allocation3], 512
    $region41: #{tpu_custom_call.1} parent=1 // pred_fallthru
      _
    // Predicated region
    $region42: #{tpu_custom_call.1} parent=1 // pred_check
      _
    $region43: #{tpu_custom_call.1} parent=1 // pred_check_branch
      %77 = sbr.rel (0) target = $region45
    $region44: #{tpu_custom_call.1} parent=1 // pred_region
      %79 = dma.done [#allocation6], 2048
    $region45: #{tpu_custom_call.1} parent=1 // pred_fallthru
      _
    // Predicated region
    $region46: #{tpu_custom_call.1} parent=1 // pred_check
      _
    $region47: #{tpu_custom_call.1} parent=1 // pred_check_branch
      %81 = sbr.rel (0) target = $region49
    $region48: #{tpu_custom_call.1} parent=1 // pred_region
      %83 = dma.done [#allocation6], 2048
    $region49: #{tpu_custom_call.1} parent=1 // pred_fallthru
      _
    %v84 = vlaneseq
    %v85 = vand.u32 %v84, 127
    %v86 = vadd.s32 %v85, 128
    %vm87 = vcmp.lt.s32.totalorder %v85, 0
    %v88 = vsub.s32 0, %v85
    %v89 = vsel %vm87, %v88, %v85
    %v90 = vshrl.u32 %v89, 6
    %v91 = vand.u32 %v89, 63
    %v92 = vsub.s32 0, %v91
    %v93 = vsel %vm87, %v92, %v91
    %vm94 = vcmp.lt.s32.totalorder %v86, 0
    %v95 = vsub.s32 0, %v86
    %v96 = vsel %vm94, %v95, %v86
    %v97 = vshrl.u32 %v96, 6
    %v98 = vand.u32 %v96, 63
    %v99 = vsub.s32 0, %v98
    %v100 = vsel %vm94, %v99, %v98
    %vm101 = vcmp.ne.s32.totalorder %v93, 0
    %vm102 = vcmp.ne.s32.totalorder %v100, 0
    %vm103 = vcmp.lt.s32.totalorder %v93, 0
    %vm104 = vcmp.lt.s32.totalorder %v100, 0
    %vm105 = vmand %vm103, %vm101
    %vm106 = vmand %vm104, %vm102
    %v107 = vadd.s32 %v93, 64
    %v108 = vadd.s32 %v100, 64
    %v109 = vsel %vm105, %v107, %v93
    %v110 = vsel %vm106, %v108, %v100
    %vm111 = vcmp.lt.s32.totalorder %v109, 32
    %vm112 = vcmp.lt.s32.totalorder %v110, 32
    %vm113 = vcmp.lt.s32.totalorder %v85, 32
    %v114 = vld [vmem:[%s0] sm:$0xff]
    %v115 = vld [vmem:[%s0 + $0x8] sm:$0xff]
    %v116 = vld [vmem:[%s0 + $0x10] sm:$0xff]
    %v117 = vld [vmem:[%s0 + $0x18] sm:$0xff]
    %v118 = vld [vmem:[%s0 + $0x20] sm:$0xff]
    %v119 = vld [vmem:[%s0 + $0x28] sm:$0xff]
    %v120 = vld [vmem:[%s0 + $0x30] sm:$0xff]
    %v121 = vld [vmem:[%s0 + $0x38] sm:$0xff]
    %v122 = vld [vmem:[#allocation2] sm:$0xff]
    %v123 = vld [vmem:[#allocation2 + $0x8] sm:$0xff]
    %v124 = vld [vmem:[#allocation2 + $0x10] sm:$0xff]
    %v125 = vld [vmem:[#allocation2 + $0x18] sm:$0xff]
    %v126 = vld [vmem:[%s2] sm:$0xff]
    %v127 = vld [vmem:[%s2 + $0x8] sm:$0xff]
    %v128 = vld [vmem:[%s2 + $0x10] sm:$0xff]
    %v129 = vld [vmem:[%s2 + $0x18] sm:$0xff]
    %v130 = vld [vmem:[%s2 + $0x20] sm:$0xff]
    %v131 = vld [vmem:[%s2 + $0x28] sm:$0xff]
    %v132 = vld [vmem:[%s2 + $0x30] sm:$0xff]
    %v133 = vld [vmem:[%s2 + $0x38] sm:$0xff]
    %v134 = vld [vmem:[%s2 + $0x40] sm:$0xff]
    %v135 = vld [vmem:[%s2 + $0x48] sm:$0xff]
    %v136 = vld [vmem:[%s2 + $0x50] sm:$0xff]
    %v137 = vld [vmem:[%s2 + $0x58] sm:$0xff]
    %v138 = vld [vmem:[%s2 + $0x60] sm:$0xff]
    %v139 = vld [vmem:[%s2 + $0x68] sm:$0xff]
    %v140 = vld [vmem:[%s2 + $0x70] sm:$0xff]
    %v141 = vld [vmem:[%s2 + $0x78] sm:$0xff]
    %v142 = vld [vmem:[%s3] sm:$0x3]
    %v144 = vperm.slane %v142, 0
    %v145 = vperm.slane %v142, 1
    %vm148 = vcmask 130048
    %v150 = vsel %vm148, %v114, 0
    %v153 = vsel %vm148, %v115, 0
    %v156 = vsel %vm148, %v116, 0
    %v159 = vsel %vm148, %v117, 0
    %v162 = vsel %vm148, %v118, 0
    %v165 = vsel %vm148, %v119, 0
    %v168 = vsel %vm148, %v120, 0
    %v171 = vsel %vm148, %v121, 0
    %173 = vmatpush.msra.mxu0 0.0
    %174 = vmatpush.msra.mxu0 0.0
    %175 = vmatpush.msra.mxu0 0.0
    %176 = vmatpush.msra.mxu0 0.0
    %177 = vmatpush.msra.mxu0 0.0
    %178 = vmatpush.msra.mxu0 0.0
    %179 = vmatpush.msra.mxu0 0.0
    %180 = vmatpush.msra.mxu0 0.0
    %181 = vmatpush.msra.mxu0 0.0
    %182 = vmatpush.msra.mxu0 0.0
    %183 = vmatpush.msra.mxu0 0.0
    %184 = vmatpush.msra.mxu0 0.0
    %185 = vmatpush.msra.mxu0 0.0
    %186 = vmatpush.msra.mxu0 0.0
    %187 = vmatpush.msra.mxu0 %v124
    %188 = vmatpush.msra.mxu0 %v122
    %189 = vmatmul.f32.gmra.mxu0 %v150
    %v190 = vpop.f32.mrf.mxu0
    %v191 = vadd.f32 %v144, %v190
    %192 = vmatmul.f32.gmra.mxu0 %v153
    %v193 = vpop.f32.mrf.mxu0
    %v194 = vadd.f32 %v144, %v193
    %195 = vmatmul.f32.gmra.mxu0 %v156
    %v196 = vpop.f32.mrf.mxu0
    %v197 = vadd.f32 %v144, %v196
    %198 = vmatmul.f32.gmra.mxu0 %v159
    %v199 = vpop.f32.mrf.mxu0
    %v200 = vadd.f32 %v144, %v199
    %201 = vmatmul.f32.gmra.mxu0 %v162
    %v202 = vpop.f32.mrf.mxu0
    %v203 = vadd.f32 %v144, %v202
    %204 = vmatmul.f32.gmra.mxu0 %v165
    %v205 = vpop.f32.mrf.mxu0
    %v206 = vadd.f32 %v144, %v205
    %207 = vmatmul.f32.gmra.mxu0 %v168
    %v208 = vpop.f32.mrf.mxu0
    %v209 = vadd.f32 %v144, %v208
    %210 = vmatmul.f32.gmra.mxu0 %v171
    %v211 = vpop.f32.mrf.mxu0
    %v212 = vadd.f32 %v144, %v211
    %213 = vdwg.mxu0
    %214 = vmatpush.msra.mxu0 0.0
    %215 = vmatpush.msra.mxu0 0.0
    %216 = vmatpush.msra.mxu0 0.0
    %217 = vmatpush.msra.mxu0 0.0
    %218 = vmatpush.msra.mxu0 0.0
    %219 = vmatpush.msra.mxu0 0.0
    %220 = vmatpush.msra.mxu0 0.0
    %221 = vmatpush.msra.mxu0 0.0
    %222 = vmatpush.msra.mxu0 0.0
    %223 = vmatpush.msra.mxu0 0.0
    %224 = vmatpush.msra.mxu0 0.0
    %225 = vmatpush.msra.mxu0 0.0
    %226 = vmatpush.msra.mxu0 0.0
    %227 = vmatpush.msra.mxu0 0.0
    %228 = vmatpush.msra.mxu0 %v125
    %229 = vmatpush.msra.mxu0 %v123
    %230 = vmatmul.f32.gmra.mxu0 %v150
    %v231 = vpop.f32.mrf.mxu0
    %v232 = vadd.f32 %v145, %v231
    %233 = vmatmul.f32.gmra.mxu0 %v153
    %v234 = vpop.f32.mrf.mxu0
    %v235 = vadd.f32 %v145, %v234
    %236 = vmatmul.f32.gmra.mxu0 %v156
    %v237 = vpop.f32.mrf.mxu0
    %v238 = vadd.f32 %v145, %v237
    %239 = vmatmul.f32.gmra.mxu0 %v159
    %v240 = vpop.f32.mrf.mxu0
    %v241 = vadd.f32 %v145, %v240
    %242 = vmatmul.f32.gmra.mxu0 %v162
    %v243 = vpop.f32.mrf.mxu0
    %v244 = vadd.f32 %v145, %v243
    %245 = vmatmul.f32.gmra.mxu0 %v165
    %v246 = vpop.f32.mrf.mxu0
    %v247 = vadd.f32 %v145, %v246
    %248 = vmatmul.f32.gmra.mxu0 %v168
    %v249 = vpop.f32.mrf.mxu0
    %v250 = vadd.f32 %v145, %v249
    %251 = vmatmul.f32.gmra.mxu0 %v171
    %v252 = vpop.f32.mrf.mxu0
    %v253 = vadd.f32 %v145, %v252
    %254 = vdwg.mxu0
    %v255 = vsel %vm111, %v191, %v212
    %v256 = vsel %vm112, %v232, %v253
    %vm257 = vcmask 523264
    %v259 = vsel %vm257, 0.0, 0
    %261 = vmatpush.msra.mxu0 0.0
    %262 = vmatpush.msra.mxu0 0.0
    %263 = vmatpush.msra.mxu0 0.0
    %264 = vmatpush.msra.mxu0 0.0
    %265 = vmatpush.msra.mxu0 0.0
    %266 = vmatpush.msra.mxu0 0.0
    %267 = vmatpush.msra.mxu0 0.0
    %268 = vmatpush.msra.mxu0 0.0
    %269 = vmatpush.msra.mxu0 %v140
    %270 = vmatpush.msra.mxu0 %v138
    %271 = vmatpush.msra.mxu0 %v136
    %272 = vmatpush.msra.mxu0 %v134
    %273 = vmatpush.msra.mxu0 %v132
    %274 = vmatpush.msra.mxu0 %v130
    %275 = vmatpush.msra.mxu0 %v128
    %276 = vmatpush.msra.mxu0 %v126
    %277 = vmatmul.f32.gmra.mxu0 %v259
    %v278 = vpop.f32.mrf.mxu0
    %v279 = vadd.f32 0.0, %v278
    %280 = vdwg.mxu0
    %281 = vmatpush.msra.mxu0 0.0
    %282 = vmatpush.msra.mxu0 0.0
    %283 = vmatpush.msra.mxu0 0.0
    %284 = vmatpush.msra.mxu0 0.0
    %285 = vmatpush.msra.mxu0 0.0
    %286 = vmatpush.msra.mxu0 0.0
    %287 = vmatpush.msra.mxu0 0.0
    %288 = vmatpush.msra.mxu0 0.0
    %289 = vmatpush.msra.mxu0 %v141
    %290 = vmatpush.msra.mxu0 %v139
    %291 = vmatpush.msra.mxu0 %v137
    %292 = vmatpush.msra.mxu0 %v135
    %293 = vmatpush.msra.mxu0 %v133
    %294 = vmatpush.msra.mxu0 %v131
    %295 = vmatpush.msra.mxu0 %v129
    %296 = vmatpush.msra.mxu0 %v127
    %297 = vmatmul.f32.gmra.mxu0 %v259
    %v298 = vpop.f32.mrf.mxu0
    %v299 = vadd.f32 0.0, %v298
    %300 = vdwg.mxu0
    %v301 = vadd.f32 %v255, %v279
    %v302 = vadd.f32 %v256, %v299
    %v303 = vxor.u32 %v301, 2147483648
    %v304 = vxor.u32 %v302, 2147483648
    %v305 = vmul.f32 %v303, 1.442695
    %v306 = vpow.pop %v305
    %v307 = vmul.f32 %v304, 1.442695
    %v308 = vpow.pop %v307
    %v309 = vadd.f32 %v306, 1.0
    %v310 = vadd.f32 %v308, 1.0
    %v311 = vrcp.pop %v309
    %v312 = vmul.f32 %v309, %v311
    %v313 = vsub.f32 1.0, %v312
    %v314 = vmul.f32 %v311, %v313
    %v315 = vadd.f32 %v311, %v314
    %vm316 = vweird.f32 %v309
    %vm317 = vweird.f32 %v311
    %vm318 = vmor %vm316, %vm317
    %v319 = vsel %vm318, %v311, %v315
    %v320 = vand.u32 2147483647, %v309
    %vm321 = vcmp.eq.f32.partialorder %v320, 8.507059e+37
    %v322 = vand.u32 %v309, 2147483648
    %v323 = vor.u32 1.1754944e-38, %v322
    %v324 = vsel %vm321, %v323, %v319
    %v325 = vmul.f32 1.0, %v324
    %v326 = vrcp.pop %v310
    %v327 = vmul.f32 %v310, %v326
    %v328 = vsub.f32 1.0, %v327
    %v329 = vmul.f32 %v326, %v328
    %v330 = vadd.f32 %v326, %v329
    %vm331 = vweird.f32 %v310
    %vm332 = vweird.f32 %v326
    %vm333 = vmor %vm331, %vm332
    %v334 = vsel %vm333, %v326, %v330
    %v335 = vand.u32 2147483647, %v310
    %vm336 = vcmp.eq.f32.partialorder %v335, 8.507059e+37
    %v337 = vand.u32 %v310, 2147483648
    %v338 = vor.u32 1.1754944e-38, %v337
    %v339 = vsel %vm336, %v338, %v334
    %v340 = vmul.f32 1.0, %v339
    %v341 = vtanh.pop %v302
    %v342 = vmul.f32 %v325, 0.0
    %344 = vrot.lane.b32.xlu0 %v341, 64
    %v345 = vpop.permute.xlu0 %344
    %v347 = vmul.f32 %v325, %v345
    %349 = vrot.lane.b32.xlu0 %v347, 64
    %v350 = vpop.permute.xlu0 %349
    %v352 = vadd.f32 %v342, %v350
    %v353 = vtanh.pop %v352
    %355 = vrot.lane.b32.xlu0 %v353, 64
    %v356 = vpop.permute.xlu0 %355
    %v358 = vmul.f32 %v340, %v356
    %v359 = vsel %vm111, %v194, %v209
    %v360 = vsel %vm112, %v235, %v250
    %v362 = vsel %vm257, %v358, 0
    %364 = vmatpush.msra.mxu0 0.0
    %365 = vmatpush.msra.mxu0 0.0
    %366 = vmatpush.msra.mxu0 0.0
    %367 = vmatpush.msra.mxu0 0.0
    %368 = vmatpush.msra.mxu0 0.0
    %369 = vmatpush.msra.mxu0 0.0
    %370 = vmatpush.msra.mxu0 0.0
    %371 = vmatpush.msra.mxu0 0.0
    %372 = vmatpush.msra.mxu0 %v140
    %373 = vmatpush.msra.mxu0 %v138
    %374 = vmatpush.msra.mxu0 %v136
    %375 = vmatpush.msra.mxu0 %v134
    %376 = vmatpush.msra.mxu0 %v132
    %377 = vmatpush.msra.mxu0 %v130
    %378 = vmatpush.msra.mxu0 %v128
    %379 = vmatpush.msra.mxu0 %v126
    %380 = vmatmul.f32.gmra.mxu0 %v362
    %v381 = vpop.f32.mrf.mxu0
    %v382 = vadd.f32 0.0, %v381
    %383 = vdwg.mxu0
    %384 = vmatpush.msra.mxu0 0.0
    %385 = vmatpush.msra.mxu0 0.0
    %386 = vmatpush.msra.mxu0 0.0
    %387 = vmatpush.msra.mxu0 0.0
    %388 = vmatpush.msra.mxu0 0.0
    %389 = vmatpush.msra.mxu0 0.0
    %390 = vmatpush.msra.mxu0 0.0
    %391 = vmatpush.msra.mxu0 0.0
    %392 = vmatpush.msra.mxu0 %v141
    %393 = vmatpush.msra.mxu0 %v139
    %394 = vmatpush.msra.mxu0 %v137
    %395 = vmatpush.msra.mxu0 %v135
    %396 = vmatpush.msra.mxu0 %v133
    %397 = vmatpush.msra.mxu0 %v131
    %398 = vmatpush.msra.mxu0 %v129
    %399 = vmatpush.msra.mxu0 %v127
    %400 = vmatmul.f32.gmra.mxu0 %v362
    %v401 = vpop.f32.mrf.mxu0
    %v402 = vadd.f32 0.0, %v401
    %403 = vdwg.mxu0
    %v404 = vadd.f32 %v359, %v382
    %v405 = vadd.f32 %v360, %v402
    %v406 = vxor.u32 %v404, 2147483648
    %v407 = vxor.u32 %v405, 2147483648
    %v408 = vmul.f32 %v406, 1.442695
    %v409 = vpow.pop %v408
    %v410 = vmul.f32 %v407, 1.442695
    %v411 = vpow.pop %v410
    %v412 = vadd.f32 %v409, 1.0
    %v413 = vadd.f32 %v411, 1.0
    %v414 = vrcp.pop %v412
    %v415 = vmul.f32 %v412, %v414
    %v416 = vsub.f32 1.0, %v415
    %v417 = vmul.f32 %v414, %v416
    %v418 = vadd.f32 %v414, %v417
    %vm419 = vweird.f32 %v412
    %vm420 = vweird.f32 %v414
    %vm421 = vmor %vm419, %vm420
    %v422 = vsel %vm421, %v414, %v418
    %v423 = vand.u32 2147483647, %v412
    %vm424 = vcmp.eq.f32.partialorder %v423, 8.507059e+37
    %v425 = vand.u32 %v412, 2147483648
    %v426 = vor.u32 1.1754944e-38, %v425
    %v427 = vsel %vm424, %v426, %v422
    %v428 = vmul.f32 1.0, %v427
    %v429 = vrcp.pop %v413
    %v430 = vmul.f32 %v413, %v429
    %v431 = vsub.f32 1.0, %v430
    %v432 = vmul.f32 %v429, %v431
    %v433 = vadd.f32 %v429, %v432
    %vm434 = vweird.f32 %v413
    %vm435 = vweird.f32 %v429
    %vm436 = vmor %vm434, %vm435
    %v437 = vsel %vm436, %v429, %v433
    %v438 = vand.u32 2147483647, %v413
    %vm439 = vcmp.eq.f32.partialorder %v438, 8.507059e+37
    %v440 = vand.u32 %v413, 2147483648
    %v441 = vor.u32 1.1754944e-38, %v440
    %v442 = vsel %vm439, %v441, %v437
    %v443 = vmul.f32 1.0, %v442
    %v444 = vtanh.pop %v405
    %v445 = vmul.f32 %v428, %v352
    %447 = vrot.lane.b32.xlu0 %v444, 64
    %v448 = vpop.permute.xlu0 %447
    %v450 = vmul.f32 %v428, %v448
    %452 = vrot.lane.b32.xlu0 %v450, 64
    %v453 = vpop.permute.xlu0 %452
    %v455 = vadd.f32 %v445, %v453
    %v456 = vtanh.pop %v455
    %458 = vrot.lane.b32.xlu0 %v456, 64
    %v459 = vpop.permute.xlu0 %458
    %v461 = vmul.f32 %v443, %v459
    %v462 = vsel %vm111, %v197, %v206
    %v463 = vsel %vm112, %v238, %v247
    %v465 = vsel %vm257, %v461, 0
    %467 = vmatpush.msra.mxu0 0.0
    %468 = vmatpush.msra.mxu0 0.0
    %469 = vmatpush.msra.mxu0 0.0
    %470 = vmatpush.msra.mxu0 0.0
    %471 = vmatpush.msra.mxu0 0.0
    %472 = vmatpush.msra.mxu0 0.0
    %473 = vmatpush.msra.mxu0 0.0
    %474 = vmatpush.msra.mxu0 0.0
    %475 = vmatpush.msra.mxu0 %v140
    %476 = vmatpush.msra.mxu0 %v138
    %477 = vmatpush.msra.mxu0 %v136
    %478 = vmatpush.msra.mxu0 %v134
    %479 = vmatpush.msra.mxu0 %v132
    %480 = vmatpush.msra.mxu0 %v130
    %481 = vmatpush.msra.mxu0 %v128
    %482 = vmatpush.msra.mxu0 %v126
    %483 = vmatmul.f32.gmra.mxu0 %v465
    %v484 = vpop.f32.mrf.mxu0
    %v485 = vadd.f32 0.0, %v484
    %486 = vdwg.mxu0
    %487 = vmatpush.msra.mxu0 0.0
    %488 = vmatpush.msra.mxu0 0.0
    %489 = vmatpush.msra.mxu0 0.0
    %490 = vmatpush.msra.mxu0 0.0
    %491 = vmatpush.msra.mxu0 0.0
    %492 = vmatpush.msra.mxu0 0.0
    %493 = vmatpush.msra.mxu0 0.0
    %494 = vmatpush.msra.mxu0 0.0
    %495 = vmatpush.msra.mxu0 %v141
    %496 = vmatpush.msra.mxu0 %v139
    %497 = vmatpush.msra.mxu0 %v137
    %498 = vmatpush.msra.mxu0 %v135
    %499 = vmatpush.msra.mxu0 %v133
    %500 = vmatpush.msra.mxu0 %v131
    %501 = vmatpush.msra.mxu0 %v129
    %502 = vmatpush.msra.mxu0 %v127
    %503 = vmatmul.f32.gmra.mxu0 %v465
    %v504 = vpop.f32.mrf.mxu0
    %v505 = vadd.f32 0.0, %v504
    %506 = vdwg.mxu0
    %v507 = vadd.f32 %v462, %v485
    %v508 = vadd.f32 %v463, %v505
    %v509 = vxor.u32 %v507, 2147483648
    %v510 = vxor.u32 %v508, 2147483648
    %v511 = vmul.f32 %v509, 1.442695
    %v512 = vpow.pop %v511
    %v513 = vmul.f32 %v510, 1.442695
    %v514 = vpow.pop %v513
    %v515 = vadd.f32 %v512, 1.0
    %v516 = vadd.f32 %v514, 1.0
    %v517 = vrcp.pop %v515
    %v518 = vmul.f32 %v515, %v517
    %v519 = vsub.f32 1.0, %v518
    %v520 = vmul.f32 %v517, %v519
    %v521 = vadd.f32 %v517, %v520
    %vm522 = vweird.f32 %v515
    %vm523 = vweird.f32 %v517
    %vm524 = vmor %vm522, %vm523
    %v525 = vsel %vm524, %v517, %v521
    %v526 = vand.u32 2147483647, %v515
    %vm527 = vcmp.eq.f32.partialorder %v526, 8.507059e+37
    %v528 = vand.u32 %v515, 2147483648
    %v529 = vor.u32 1.1754944e-38, %v528
    %v530 = vsel %vm527, %v529, %v525
    %v531 = vmul.f32 1.0, %v530
    %v532 = vrcp.pop %v516
    %v533 = vmul.f32 %v516, %v532
    %v534 = vsub.f32 1.0, %v533
    %v535 = vmul.f32 %v532, %v534
    %v536 = vadd.f32 %v532, %v535
    %vm537 = vweird.f32 %v516
    %vm538 = vweird.f32 %v532
    %vm539 = vmor %vm537, %vm538
    %v540 = vsel %vm539, %v532, %v536
    %v541 = vand.u32 2147483647, %v516
    %vm542 = vcmp.eq.f32.partialorder %v541, 8.507059e+37
    %v543 = vand.u32 %v516, 2147483648
    %v544 = vor.u32 1.1754944e-38, %v543
    %v545 = vsel %vm542, %v544, %v540
    %v546 = vmul.f32 1.0, %v545
    %v547 = vtanh.pop %v508
    %v548 = vmul.f32 %v531, %v455
    %550 = vrot.lane.b32.xlu0 %v547, 64
    %v551 = vpop.permute.xlu0 %550
    %v553 = vmul.f32 %v531, %v551
    %555 = vrot.lane.b32.xlu0 %v553, 64
    %v556 = vpop.permute.xlu0 %555
    %v558 = vadd.f32 %v548, %v556
    %v559 = vtanh.pop %v558
    %561 = vrot.lane.b32.xlu0 %v559, 64
    %v562 = vpop.permute.xlu0 %561
    %v564 = vmul.f32 %v546, %v562
    %v565 = vsel %vm111, %v200, %v203
    %v566 = vsel %vm112, %v241, %v244
    %v568 = vsel %vm257, %v564, 0
    %570 = vmatpush.msra.mxu0 0.0
    %571 = vmatpush.msra.mxu0 0.0
    %572 = vmatpush.msra.mxu0 0.0
    %573 = vmatpush.msra.mxu0 0.0
    %574 = vmatpush.msra.mxu0 0.0
    %575 = vmatpush.msra.mxu0 0.0
    %576 = vmatpush.msra.mxu0 0.0
    %577 = vmatpush.msra.mxu0 0.0
    %578 = vmatpush.msra.mxu0 %v140
    %579 = vmatpush.msra.mxu0 %v138
    %580 = vmatpush.msra.mxu0 %v136
    %581 = vmatpush.msra.mxu0 %v134
    %582 = vmatpush.msra.mxu0 %v132
    %583 = vmatpush.msra.mxu0 %v130
    %584 = vmatpush.msra.mxu0 %v128
    %585 = vmatpush.msra.mxu0 %v126
    %586 = vmatmul.f32.gmra.mxu0 %v568
    %v587 = vpop.f32.mrf.mxu0
    %v588 = vadd.f32 0.0, %v587
    %589 = vdwg.mxu0
    %590 = vmatpush.msra.mxu0 0.0
    %591 = vmatpush.msra.mxu0 0.0
    %592 = vmatpush.msra.mxu0 0.0
    %593 = vmatpush.msra.mxu0 0.0
    %594 = vmatpush.msra.mxu0 0.0
    %595 = vmatpush.msra.mxu0 0.0
    %596 = vmatpush.msra.mxu0 0.0
    %597 = vmatpush.msra.mxu0 0.0
    %598 = vmatpush.msra.mxu0 %v141
    %599 = vmatpush.msra.mxu0 %v139
    %600 = vmatpush.msra.mxu0 %v137
    %601 = vmatpush.msra.mxu0 %v135
    %602 = vmatpush.msra.mxu0 %v133
    %603 = vmatpush.msra.mxu0 %v131
    %604 = vmatpush.msra.mxu0 %v129
    %605 = vmatpush.msra.mxu0 %v127
    %606 = vmatmul.f32.gmra.mxu0 %v568
    %v607 = vpop.f32.mrf.mxu0
    %v608 = vadd.f32 0.0, %v607
    %609 = vdwg.mxu0
    %v610 = vadd.f32 %v565, %v588
    %v611 = vadd.f32 %v566, %v608
    %v612 = vxor.u32 %v610, 2147483648
    %v613 = vxor.u32 %v611, 2147483648
    %v614 = vmul.f32 %v612, 1.442695
    %v615 = vpow.pop %v614
    %v616 = vmul.f32 %v613, 1.442695
    %v617 = vpow.pop %v616
    %v618 = vadd.f32 %v615, 1.0
    %v619 = vadd.f32 %v617, 1.0
    %v620 = vrcp.pop %v618
    %v621 = vmul.f32 %v618, %v620
    %v622 = vsub.f32 1.0, %v621
    %v623 = vmul.f32 %v620, %v622
    %v624 = vadd.f32 %v620, %v623
    %vm625 = vweird.f32 %v618
    %vm626 = vweird.f32 %v620
    %vm627 = vmor %vm625, %vm626
    %v628 = vsel %vm627, %v620, %v624
    %v629 = vand.u32 2147483647, %v618
    %vm630 = vcmp.eq.f32.partialorder %v629, 8.507059e+37
    %v631 = vand.u32 %v618, 2147483648
    %v632 = vor.u32 1.1754944e-38, %v631
    %v633 = vsel %vm630, %v632, %v628
    %v634 = vmul.f32 1.0, %v633
    %v635 = vrcp.pop %v619
    %v636 = vmul.f32 %v619, %v635
    %v637 = vsub.f32 1.0, %v636
    %v638 = vmul.f32 %v635, %v637
    %v639 = vadd.f32 %v635, %v638
    %vm640 = vweird.f32 %v619
    %vm641 = vweird.f32 %v635
    %vm642 = vmor %vm640, %vm641
    %v643 = vsel %vm642, %v635, %v639
    %v644 = vand.u32 2147483647, %v619
    %vm645 = vcmp.eq.f32.partialorder %v644, 8.507059e+37
    %v646 = vand.u32 %v619, 2147483648
    %v647 = vor.u32 1.1754944e-38, %v646
    %v648 = vsel %vm645, %v647, %v643
    %v649 = vmul.f32 1.0, %v648
    %v650 = vtanh.pop %v611
    %v651 = vmul.f32 %v634, %v558
    %653 = vrot.lane.b32.xlu0 %v650, 64
    %v654 = vpop.permute.xlu0 %653
    %v656 = vmul.f32 %v634, %v654
    %658 = vrot.lane.b32.xlu0 %v656, 64
    %v659 = vpop.permute.xlu0 %658
    %v661 = vadd.f32 %v651, %v659
    %v662 = vtanh.pop %v661
    %664 = vrot.lane.b32.xlu0 %v662, 64
    %v665 = vpop.permute.xlu0 %664
    %v667 = vmul.f32 %v649, %v665
    %v668 = vsel %vm111, %v203, %v200
    %v669 = vsel %vm112, %v244, %v241
    %v671 = vsel %vm257, %v667, 0
    %673 = vmatpush.msra.mxu0 0.0
    %674 = vmatpush.msra.mxu0 0.0
    %675 = vmatpush.msra.mxu0 0.0
    %676 = vmatpush.msra.mxu0 0.0
    %677 = vmatpush.msra.mxu0 0.0
    %678 = vmatpush.msra.mxu0 0.0
    %679 = vmatpush.msra.mxu0 0.0
    %680 = vmatpush.msra.mxu0 0.0
    %681 = vmatpush.msra.mxu0 %v140
    %682 = vmatpush.msra.mxu0 %v138
    %683 = vmatpush.msra.mxu0 %v136
    %684 = vmatpush.msra.mxu0 %v134
    %685 = vmatpush.msra.mxu0 %v132
    %686 = vmatpush.msra.mxu0 %v130
    %687 = vmatpush.msra.mxu0 %v128
    %688 = vmatpush.msra.mxu0 %v126
    %689 = vmatmul.f32.gmra.mxu0 %v671
    %v690 = vpop.f32.mrf.mxu0
    %v691 = vadd.f32 0.0, %v690
    %692 = vdwg.mxu0
    %693 = vmatpush.msra.mxu0 0.0
    %694 = vmatpush.msra.mxu0 0.0
    %695 = vmatpush.msra.mxu0 0.0
    %696 = vmatpush.msra.mxu0 0.0
    %697 = vmatpush.msra.mxu0 0.0
    %698 = vmatpush.msra.mxu0 0.0
    %699 = vmatpush.msra.mxu0 0.0
    %700 = vmatpush.msra.mxu0 0.0
    %701 = vmatpush.msra.mxu0 %v141
    %702 = vmatpush.msra.mxu0 %v139
    %703 = vmatpush.msra.mxu0 %v137
    %704 = vmatpush.msra.mxu0 %v135
    %705 = vmatpush.msra.mxu0 %v133
    %706 = vmatpush.msra.mxu0 %v131
    %707 = vmatpush.msra.mxu0 %v129
    %708 = vmatpush.msra.mxu0 %v127
    %709 = vmatmul.f32.gmra.mxu0 %v671
    %v710 = vpop.f32.mrf.mxu0
    %v711 = vadd.f32 0.0, %v710
    %712 = vdwg.mxu0
    %v713 = vadd.f32 %v668, %v691
    %v714 = vadd.f32 %v669, %v711
    %v715 = vxor.u32 %v713, 2147483648
    %v716 = vxor.u32 %v714, 2147483648
    %v717 = vmul.f32 %v715, 1.442695
    %v718 = vpow.pop %v717
    %v719 = vmul.f32 %v716, 1.442695
    %v720 = vpow.pop %v719
    %v721 = vadd.f32 %v718, 1.0
    %v722 = vadd.f32 %v720, 1.0
    %v723 = vrcp.pop %v721
    %v724 = vmul.f32 %v721, %v723
    %v725 = vsub.f32 1.0, %v724
    %v726 = vmul.f32 %v723, %v725
    %v727 = vadd.f32 %v723, %v726
    %vm728 = vweird.f32 %v721
    %vm729 = vweird.f32 %v723
    %vm730 = vmor %vm728, %vm729
    %v731 = vsel %vm730, %v723, %v727
    %v732 = vand.u32 2147483647, %v721
    %vm733 = vcmp.eq.f32.partialorder %v732, 8.507059e+37
    %v734 = vand.u32 %v721, 2147483648
    %v735 = vor.u32 1.1754944e-38, %v734
    %v736 = vsel %vm733, %v735, %v731
    %v737 = vmul.f32 1.0, %v736
    %v738 = vrcp.pop %v722
    %v739 = vmul.f32 %v722, %v738
    %v740 = vsub.f32 1.0, %v739
    %v741 = vmul.f32 %v738, %v740
    %v742 = vadd.f32 %v738, %v741
    %vm743 = vweird.f32 %v722
    %vm744 = vweird.f32 %v738
    %vm745 = vmor %vm743, %vm744
    %v746 = vsel %vm745, %v738, %v742
    %v747 = vand.u32 2147483647, %v722
    %vm748 = vcmp.eq.f32.partialorder %v747, 8.507059e+37
    %v749 = vand.u32 %v722, 2147483648
    %v750 = vor.u32 1.1754944e-38, %v749
    %v751 = vsel %vm748, %v750, %v746
    %v752 = vmul.f32 1.0, %v751
    %v753 = vtanh.pop %v714
    %v754 = vmul.f32 %v737, %v661
    %756 = vrot.lane.b32.xlu0 %v753, 64
    %v757 = vpop.permute.xlu0 %756
    %v759 = vmul.f32 %v737, %v757
    %761 = vrot.lane.b32.xlu0 %v759, 64
    %v762 = vpop.permute.xlu0 %761
    %v764 = vadd.f32 %v754, %v762
    %v765 = vtanh.pop %v764
    %767 = vrot.lane.b32.xlu0 %v765, 64
    %v768 = vpop.permute.xlu0 %767
    %v770 = vmul.f32 %v752, %v768
    %v771 = vsel %vm111, %v206, %v197
    %v772 = vsel %vm112, %v247, %v238
    %v774 = vsel %vm257, %v770, 0
    %776 = vmatpush.msra.mxu0 0.0
    %777 = vmatpush.msra.mxu0 0.0
    %778 = vmatpush.msra.mxu0 0.0
    %779 = vmatpush.msra.mxu0 0.0
    %780 = vmatpush.msra.mxu0 0.0
    %781 = vmatpush.msra.mxu0 0.0
    %782 = vmatpush.msra.mxu0 0.0
    %783 = vmatpush.msra.mxu0 0.0
    %784 = vmatpush.msra.mxu0 %v140
    %785 = vmatpush.msra.mxu0 %v138
    %786 = vmatpush.msra.mxu0 %v136
    %787 = vmatpush.msra.mxu0 %v134
    %788 = vmatpush.msra.mxu0 %v132
    %789 = vmatpush.msra.mxu0 %v130
    %790 = vmatpush.msra.mxu0 %v128
    %791 = vmatpush.msra.mxu0 %v126
    %792 = vmatmul.f32.gmra.mxu0 %v774
    %v793 = vpop.f32.mrf.mxu0
    %v794 = vadd.f32 0.0, %v793
    %795 = vdwg.mxu0
    %796 = vmatpush.msra.mxu0 0.0
    %797 = vmatpush.msra.mxu0 0.0
    %798 = vmatpush.msra.mxu0 0.0
    %799 = vmatpush.msra.mxu0 0.0
    %800 = vmatpush.msra.mxu0 0.0
    %801 = vmatpush.msra.mxu0 0.0
    %802 = vmatpush.msra.mxu0 0.0
    %803 = vmatpush.msra.mxu0 0.0
    %804 = vmatpush.msra.mxu0 %v141
    %805 = vmatpush.msra.mxu0 %v139
    %806 = vmatpush.msra.mxu0 %v137
    %807 = vmatpush.msra.mxu0 %v135
    %808 = vmatpush.msra.mxu0 %v133
    %809 = vmatpush.msra.mxu0 %v131
    %810 = vmatpush.msra.mxu0 %v129
    %811 = vmatpush.msra.mxu0 %v127
    %812 = vmatmul.f32.gmra.mxu0 %v774
    %v813 = vpop.f32.mrf.mxu0
    %v814 = vadd.f32 0.0, %v813
    %815 = vdwg.mxu0
    %v816 = vadd.f32 %v771, %v794
    %v817 = vadd.f32 %v772, %v814
    %v818 = vxor.u32 %v816, 2147483648
    %v819 = vxor.u32 %v817, 2147483648
    %v820 = vmul.f32 %v818, 1.442695
    %v821 = vpow.pop %v820
    %v822 = vmul.f32 %v819, 1.442695
    %v823 = vpow.pop %v822
    %v824 = vadd.f32 %v821, 1.0
    %v825 = vadd.f32 %v823, 1.0
    %v826 = vrcp.pop %v824
    %v827 = vmul.f32 %v824, %v826
    %v828 = vsub.f32 1.0, %v827
    %v829 = vmul.f32 %v826, %v828
    %v830 = vadd.f32 %v826, %v829
    %vm831 = vweird.f32 %v824
    %vm832 = vweird.f32 %v826
    %vm833 = vmor %vm831, %vm832
    %v834 = vsel %vm833, %v826, %v830
    %v835 = vand.u32 2147483647, %v824
    %vm836 = vcmp.eq.f32.partialorder %v835, 8.507059e+37
    %v837 = vand.u32 %v824, 2147483648
    %v838 = vor.u32 1.1754944e-38, %v837
    %v839 = vsel %vm836, %v838, %v834
    %v840 = vmul.f32 1.0, %v839
    %v841 = vrcp.pop %v825
    %v842 = vmul.f32 %v825, %v841
    %v843 = vsub.f32 1.0, %v842
    %v844 = vmul.f32 %v841, %v843
    %v845 = vadd.f32 %v841, %v844
    %vm846 = vweird.f32 %v825
    %vm847 = vweird.f32 %v841
    %vm848 = vmor %vm846, %vm847
    %v849 = vsel %vm848, %v841, %v845
    %v850 = vand.u32 2147483647, %v825
    %vm851 = vcmp.eq.f32.partialorder %v850, 8.507059e+37
    %v852 = vand.u32 %v825, 2147483648
    %v853 = vor.u32 1.1754944e-38, %v852
    %v854 = vsel %vm851, %v853, %v849
    %v855 = vmul.f32 1.0, %v854
    %v856 = vtanh.pop %v817
    %v857 = vmul.f32 %v840, %v764
    %859 = vrot.lane.b32.xlu0 %v856, 64
    %v860 = vpop.permute.xlu0 %859
    %v862 = vmul.f32 %v840, %v860
    %864 = vrot.lane.b32.xlu0 %v862, 64
    %v865 = vpop.permute.xlu0 %864
    %v867 = vadd.f32 %v857, %v865
    %v868 = vtanh.pop %v867
    %870 = vrot.lane.b32.xlu0 %v868, 64
    %v871 = vpop.permute.xlu0 %870
    %v873 = vmul.f32 %v855, %v871
    %v874 = vsel %vm111, %v209, %v194
    %v875 = vsel %vm112, %v250, %v235
    %v877 = vsel %vm257, %v873, 0
    %879 = vmatpush.msra.mxu0 0.0
    %880 = vmatpush.msra.mxu0 0.0
    %881 = vmatpush.msra.mxu0 0.0
    %882 = vmatpush.msra.mxu0 0.0
    %883 = vmatpush.msra.mxu0 0.0
    %884 = vmatpush.msra.mxu0 0.0
    %885 = vmatpush.msra.mxu0 0.0
    %886 = vmatpush.msra.mxu0 0.0
    %887 = vmatpush.msra.mxu0 %v140
    %888 = vmatpush.msra.mxu0 %v138
    %889 = vmatpush.msra.mxu0 %v136
    %890 = vmatpush.msra.mxu0 %v134
    %891 = vmatpush.msra.mxu0 %v132
    %892 = vmatpush.msra.mxu0 %v130
    %893 = vmatpush.msra.mxu0 %v128
    %894 = vmatpush.msra.mxu0 %v126
    %895 = vmatmul.f32.gmra.mxu0 %v877
    %v896 = vpop.f32.mrf.mxu0
    %v897 = vadd.f32 0.0, %v896
    %898 = vdwg.mxu0
    %899 = vmatpush.msra.mxu0 0.0
    %900 = vmatpush.msra.mxu0 0.0
    %901 = vmatpush.msra.mxu0 0.0
    %902 = vmatpush.msra.mxu0 0.0
    %903 = vmatpush.msra.mxu0 0.0
    %904 = vmatpush.msra.mxu0 0.0
    %905 = vmatpush.msra.mxu0 0.0
    %906 = vmatpush.msra.mxu0 0.0
    %907 = vmatpush.msra.mxu0 %v141
    %908 = vmatpush.msra.mxu0 %v139
    %909 = vmatpush.msra.mxu0 %v137
    %910 = vmatpush.msra.mxu0 %v135
    %911 = vmatpush.msra.mxu0 %v133
    %912 = vmatpush.msra.mxu0 %v131
    %913 = vmatpush.msra.mxu0 %v129
    %914 = vmatpush.msra.mxu0 %v127
    %915 = vmatmul.f32.gmra.mxu0 %v877
    %v916 = vpop.f32.mrf.mxu0
    %v917 = vadd.f32 0.0, %v916
    %918 = vdwg.mxu0
    %v919 = vadd.f32 %v874, %v897
    %v920 = vadd.f32 %v875, %v917
    %v921 = vxor.u32 %v919, 2147483648
    %v922 = vxor.u32 %v920, 2147483648
    %v923 = vmul.f32 %v921, 1.442695
    %v924 = vpow.pop %v923
    %v925 = vmul.f32 %v922, 1.442695
    %v926 = vpow.pop %v925
    %v927 = vadd.f32 %v924, 1.0
    %v928 = vadd.f32 %v926, 1.0
    %v929 = vrcp.pop %v927
    %v930 = vmul.f32 %v927, %v929
    %v931 = vsub.f32 1.0, %v930
    %v932 = vmul.f32 %v929, %v931
    %v933 = vadd.f32 %v929, %v932
    %vm934 = vweird.f32 %v927
    %vm935 = vweird.f32 %v929
    %vm936 = vmor %vm934, %vm935
    %v937 = vsel %vm936, %v929, %v933
    %v938 = vand.u32 2147483647, %v927
    %vm939 = vcmp.eq.f32.partialorder %v938, 8.507059e+37
    %v940 = vand.u32 %v927, 2147483648
    %v941 = vor.u32 1.1754944e-38, %v940
    %v942 = vsel %vm939, %v941, %v937
    %v943 = vmul.f32 1.0, %v942
    %v944 = vrcp.pop %v928
    %v945 = vmul.f32 %v928, %v944
    %v946 = vsub.f32 1.0, %v945
    %v947 = vmul.f32 %v944, %v946
    %v948 = vadd.f32 %v944, %v947
    %vm949 = vweird.f32 %v928
    %vm950 = vweird.f32 %v944
    %vm951 = vmor %vm949, %vm950
    %v952 = vsel %vm951, %v944, %v948
    %v953 = vand.u32 2147483647, %v928
    %vm954 = vcmp.eq.f32.partialorder %v953, 8.507059e+37
    %v955 = vand.u32 %v928, 2147483648
    %v956 = vor.u32 1.1754944e-38, %v955
    %v957 = vsel %vm954, %v956, %v952
    %v958 = vmul.f32 1.0, %v957
    %v959 = vtanh.pop %v920
    %v960 = vmul.f32 %v943, %v867
    %962 = vrot.lane.b32.xlu0 %v959, 64
    %v963 = vpop.permute.xlu0 %962
    %v965 = vmul.f32 %v943, %v963
    %967 = vrot.lane.b32.xlu0 %v965, 64
    %v968 = vpop.permute.xlu0 %967
    %v970 = vadd.f32 %v960, %v968
    %v971 = vtanh.pop %v970
    %973 = vrot.lane.b32.xlu0 %v971, 64
    %v974 = vpop.permute.xlu0 %973
    %v976 = vmul.f32 %v958, %v974
    %v977 = vsel %vm111, %v212, %v191
    %v978 = vsel %vm112, %v253, %v232
    %v980 = vsel %vm257, %v976, 0
    %982 = vmatpush.msra.mxu0 0.0
    %983 = vmatpush.msra.mxu0 0.0
    %984 = vmatpush.msra.mxu0 0.0
    %985 = vmatpush.msra.mxu0 0.0
    %986 = vmatpush.msra.mxu0 0.0
    %987 = vmatpush.msra.mxu0 0.0
    %988 = vmatpush.msra.mxu0 0.0
    %989 = vmatpush.msra.mxu0 0.0
    %990 = vmatpush.msra.mxu0 %v140
    %991 = vmatpush.msra.mxu0 %v138
    %992 = vmatpush.msra.mxu0 %v136
    %993 = vmatpush.msra.mxu0 %v134
    %994 = vmatpush.msra.mxu0 %v132
    %995 = vmatpush.msra.mxu0 %v130
    %996 = vmatpush.msra.mxu0 %v128
    %997 = vmatpush.msra.mxu0 %v126
    %998 = vmatmul.f32.gmra.mxu0 %v980
    %v999 = vpop.f32.mrf.mxu0
    %v1000 = vadd.f32 0.0, %v999
    %1001 = vdwg.mxu0
    %1002 = vmatpush.msra.mxu0 0.0
    %1003 = vmatpush.msra.mxu0 0.0
    %1004 = vmatpush.msra.mxu0 0.0
    %1005 = vmatpush.msra.mxu0 0.0
    %1006 = vmatpush.msra.mxu0 0.0
    %1007 = vmatpush.msra.mxu0 0.0
    %1008 = vmatpush.msra.mxu0 0.0
    %1009 = vmatpush.msra.mxu0 0.0
    %1010 = vmatpush.msra.mxu0 %v141
    %1011 = vmatpush.msra.mxu0 %v139
    %1012 = vmatpush.msra.mxu0 %v137
    %1013 = vmatpush.msra.mxu0 %v135
    %1014 = vmatpush.msra.mxu0 %v133
    %1015 = vmatpush.msra.mxu0 %v131
    %1016 = vmatpush.msra.mxu0 %v129
    %1017 = vmatpush.msra.mxu0 %v127
    %1018 = vmatmul.f32.gmra.mxu0 %v980
    %v1019 = vpop.f32.mrf.mxu0
    %v1020 = vadd.f32 0.0, %v1019
    %1021 = vdwg.mxu0
    %v1022 = vadd.f32 %v977, %v1000
    %v1023 = vadd.f32 %v978, %v1020
    %v1024 = vxor.u32 %v1022, 2147483648
    %v1025 = vxor.u32 %v1023, 2147483648
    %v1026 = vmul.f32 %v1024, 1.442695
    %v1027 = vpow.pop %v1026
    %v1028 = vmul.f32 %v1025, 1.442695
    %v1029 = vpow.pop %v1028
    %v1030 = vadd.f32 %v1027, 1.0
    %v1031 = vadd.f32 %v1029, 1.0
    %v1032 = vrcp.pop %v1030
    %v1033 = vmul.f32 %v1030, %v1032
    %v1034 = vsub.f32 1.0, %v1033
    %v1035 = vmul.f32 %v1032, %v1034
    %v1036 = vadd.f32 %v1032, %v1035
    %vm1037 = vweird.f32 %v1030
    %vm1038 = vweird.f32 %v1032
    %vm1039 = vmor %vm1037, %vm1038
    %v1040 = vsel %vm1039, %v1032, %v1036
    %v1041 = vand.u32 2147483647, %v1030
    %vm1042 = vcmp.eq.f32.partialorder %v1041, 8.507059e+37
    %v1043 = vand.u32 %v1030, 2147483648
    %v1044 = vor.u32 1.1754944e-38, %v1043
    %v1045 = vsel %vm1042, %v1044, %v1040
    %v1046 = vmul.f32 1.0, %v1045
    %v1047 = vrcp.pop %v1031
    %v1048 = vmul.f32 %v1031, %v1047
    %v1049 = vsub.f32 1.0, %v1048
    %v1050 = vmul.f32 %v1047, %v1049
    %v1051 = vadd.f32 %v1047, %v1050
    %vm1052 = vweird.f32 %v1031
    %vm1053 = vweird.f32 %v1047
    %vm1054 = vmor %vm1052, %vm1053
    %v1055 = vsel %vm1054, %v1047, %v1051
    %v1056 = vand.u32 2147483647, %v1031
    %vm1057 = vcmp.eq.f32.partialorder %v1056, 8.507059e+37
    %v1058 = vand.u32 %v1031, 2147483648
    %v1059 = vor.u32 1.1754944e-38, %v1058
    %v1060 = vsel %vm1057, %v1059, %v1055
    %v1061 = vmul.f32 1.0, %v1060
    %v1062 = vtanh.pop %v1023
    %v1063 = vmul.f32 %v1046, %v970
    %1065 = vrot.lane.b32.xlu0 %v1062, 64
    %v1066 = vpop.permute.xlu0 %1065
    %v1068 = vmul.f32 %v1046, %v1066
    %1070 = vrot.lane.b32.xlu0 %v1068, 64
    %v1071 = vpop.permute.xlu0 %1070
    %v1073 = vadd.f32 %v1063, %v1071
    %v1074 = vtanh.pop %v1073
    %1076 = vrot.lane.b32.xlu0 %v1074, 64
    %v1077 = vpop.permute.xlu0 %1076
    %v1079 = vmul.f32 %v1061, %v1077
    %v1080 = vsel %vm113, %v358, %v1079
    %v1081 = vsel %vm113, %v461, %v976
    %v1082 = vsel %vm113, %v564, %v873
    %v1083 = vsel %vm113, %v667, %v770
    %v1084 = vsel %vm113, %v770, %v667
    %v1085 = vsel %vm113, %v873, %v564
    %v1086 = vsel %vm113, %v976, %v461
    %v1087 = vsel %vm113, %v1079, %v358
    %1088 = vst.msk [vmem:[#allocation9] sm:$0xff] %vm257, %v1079
    %1090 = vrot.lane.b32.xlu0 %v1073, 64
    %v1091 = vpop.permute.xlu0 %1090
    %1093 = vst.msk [vmem:[#allocation11] sm:$0xff] %vm257, %v1091
    %v1094 = vld [vmem:[#allocation5] sm:$0xff]
    %v1095 = vld [vmem:[#allocation5 + $0x8] sm:$0xff]
    %v1096 = vld [vmem:[#allocation5 + $0x10] sm:$0xff]
    %v1097 = vld [vmem:[#allocation5 + $0x18] sm:$0xff]
    %v1098 = vld [vmem:[#allocation5 + $0x20] sm:$0xff]
    %v1099 = vld [vmem:[#allocation5 + $0x28] sm:$0xff]
    %v1100 = vld [vmem:[#allocation5 + $0x30] sm:$0xff]
    %v1101 = vld [vmem:[#allocation5 + $0x38] sm:$0xff]
    %v1102 = vld [vmem:[#allocation5 + $0x40] sm:$0xff]
    %v1103 = vld [vmem:[#allocation5 + $0x48] sm:$0xff]
    %v1104 = vld [vmem:[#allocation5 + $0x50] sm:$0xff]
    %v1105 = vld [vmem:[#allocation5 + $0x58] sm:$0xff]
    %v1106 = vld [vmem:[#allocation5 + $0x60] sm:$0xff]
    %v1107 = vld [vmem:[#allocation5 + $0x68] sm:$0xff]
    %v1108 = vld [vmem:[#allocation5 + $0x70] sm:$0xff]
    %v1109 = vld [vmem:[#allocation5 + $0x78] sm:$0xff]
    %v1110 = vld [vmem:[#allocation7] sm:$0xff]
    %v1111 = vld [vmem:[#allocation7 + $0x8] sm:$0xff]
    %v1112 = vld [vmem:[#allocation7 + $0x10] sm:$0xff]
    %v1113 = vld [vmem:[#allocation7 + $0x18] sm:$0xff]
    %v1114 = vld [vmem:[#allocation7 + $0x20] sm:$0xff]
    %v1115 = vld [vmem:[#allocation7 + $0x28] sm:$0xff]
    %v1116 = vld [vmem:[#allocation7 + $0x30] sm:$0xff]
    %v1117 = vld [vmem:[#allocation7 + $0x38] sm:$0xff]
    %v1118 = vld [vmem:[#allocation7 + $0x40] sm:$0xff]
    %v1119 = vld [vmem:[#allocation7 + $0x48] sm:$0xff]
    %v1120 = vld [vmem:[#allocation7 + $0x50] sm:$0xff]
    %v1121 = vld [vmem:[#allocation7 + $0x58] sm:$0xff]
    %v1122 = vld [vmem:[#allocation7 + $0x60] sm:$0xff]
    %v1123 = vld [vmem:[#allocation7 + $0x68] sm:$0xff]
    %v1124 = vld [vmem:[#allocation7 + $0x70] sm:$0xff]
    %v1125 = vld [vmem:[#allocation7 + $0x78] sm:$0xff]
    %v1126 = vld [vmem:[%s6] sm:$0x3]
    %v1128 = vperm.slane %v1126, 0
    %v1129 = vperm.slane %v1126, 1
    %v1133 = vsel %vm257, %v1080, 0
    %v1136 = vsel %vm257, %v1081, 0
    %v1139 = vsel %vm257, %v1082, 0
    %v1142 = vsel %vm257, %v1083, 0
    %v1145 = vsel %vm257, %v1084, 0
    %v1148 = vsel %vm257, %v1085, 0
    %v1151 = vsel %vm257, %v1086, 0
    %v1154 = vsel %vm257, %v1087, 0
    %1156 = vmatpush.msra.mxu0 0.0
    %1157 = vmatpush.msra.mxu0 0.0
    %1158 = vmatpush.msra.mxu0 0.0
    %1159 = vmatpush.msra.mxu0 0.0
    %1160 = vmatpush.msra.mxu0 0.0
    %1161 = vmatpush.msra.mxu0 0.0
    %1162 = vmatpush.msra.mxu0 0.0
    %1163 = vmatpush.msra.mxu0 0.0
    %1164 = vmatpush.msra.mxu0 %v1108
    %1165 = vmatpush.msra.mxu0 %v1106
    %1166 = vmatpush.msra.mxu0 %v1104
    %1167 = vmatpush.msra.mxu0 %v1102
    %1168 = vmatpush.msra.mxu0 %v1100
    %1169 = vmatpush.msra.mxu0 %v1098
    %1170 = vmatpush.msra.mxu0 %v1096
    %1171 = vmatpush.msra.mxu0 %v1094
    %1172 = vmatmul.f32.gmra.mxu0 %v1133
    %v1173 = vpop.f32.mrf.mxu0
    %v1174 = vadd.f32 %v1128, %v1173
    %1175 = vmatmul.f32.gmra.mxu0 %v1136
    %v1176 = vpop.f32.mrf.mxu0
    %v1177 = vadd.f32 %v1128, %v1176
    %1178 = vmatmul.f32.gmra.mxu0 %v1139
    %v1179 = vpop.f32.mrf.mxu0
    %v1180 = vadd.f32 %v1128, %v1179
    %1181 = vmatmul.f32.gmra.mxu0 %v1142
    %v1182 = vpop.f32.mrf.mxu0
    %v1183 = vadd.f32 %v1128, %v1182
    %1184 = vmatmul.f32.gmra.mxu0 %v1145
    %v1185 = vpop.f32.mrf.mxu0
    %v1186 = vadd.f32 %v1128, %v1185
    %1187 = vmatmul.f32.gmra.mxu0 %v1148
    %v1188 = vpop.f32.mrf.mxu0
    %v1189 = vadd.f32 %v1128, %v1188
    %1190 = vmatmul.f32.gmra.mxu0 %v1151
    %v1191 = vpop.f32.mrf.mxu0
    %v1192 = vadd.f32 %v1128, %v1191
    %1193 = vmatmul.f32.gmra.mxu0 %v1154
    %v1194 = vpop.f32.mrf.mxu0
    %v1195 = vadd.f32 %v1128, %v1194
    %1196 = vdwg.mxu0
    %1197 = vmatpush.msra.mxu0 0.0
    %1198 = vmatpush.msra.mxu0 0.0
    %1199 = vmatpush.msra.mxu0 0.0
    %1200 = vmatpush.msra.mxu0 0.0
    %1201 = vmatpush.msra.mxu0 0.0
    %1202 = vmatpush.msra.mxu0 0.0
    %1203 = vmatpush.msra.mxu0 0.0
    %1204 = vmatpush.msra.mxu0 0.0
    %1205 = vmatpush.msra.mxu0 %v1109
    %1206 = vmatpush.msra.mxu0 %v1107
    %1207 = vmatpush.msra.mxu0 %v1105
    %1208 = vmatpush.msra.mxu0 %v1103
    %1209 = vmatpush.msra.mxu0 %v1101
    %1210 = vmatpush.msra.mxu0 %v1099
    %1211 = vmatpush.msra.mxu0 %v1097
    %1212 = vmatpush.msra.mxu0 %v1095
    %1213 = vmatmul.f32.gmra.mxu0 %v1133
    %v1214 = vpop.f32.mrf.mxu0
    %v1215 = vadd.f32 %v1129, %v1214
    %1216 = vmatmul.f32.gmra.mxu0 %v1136
    %v1217 = vpop.f32.mrf.mxu0
    %v1218 = vadd.f32 %v1129, %v1217
    %1219 = vmatmul.f32.gmra.mxu0 %v1139
    %v1220 = vpop.f32.mrf.mxu0
    %v1221 = vadd.f32 %v1129, %v1220
    %1222 = vmatmul.f32.gmra.mxu0 %v1142
    %v1223 = vpop.f32.mrf.mxu0
    %v1224 = vadd.f32 %v1129, %v1223
    %1225 = vmatmul.f32.gmra.mxu0 %v1145
    %v1226 = vpop.f32.mrf.mxu0
    %v1227 = vadd.f32 %v1129, %v1226
    %1228 = vmatmul.f32.gmra.mxu0 %v1148
    %v1229 = vpop.f32.mrf.mxu0
    %v1230 = vadd.f32 %v1129, %v1229
    %1231 = vmatmul.f32.gmra.mxu0 %v1151
    %v1232 = vpop.f32.mrf.mxu0
    %v1233 = vadd.f32 %v1129, %v1232
    %1234 = vmatmul.f32.gmra.mxu0 %v1154
    %v1235 = vpop.f32.mrf.mxu0
    %v1236 = vadd.f32 %v1129, %v1235
    %1237 = vdwg.mxu0
    %v1238 = vsel %vm111, %v1174, %v1195
    %v1239 = vsel %vm112, %v1215, %v1236
    %1240 = vmatpush.msra.mxu0 0.0
    %1241 = vmatpush.msra.mxu0 0.0
    %1242 = vmatpush.msra.mxu0 0.0
    %1243 = vmatpush.msra.mxu0 0.0
    %1244 = vmatpush.msra.mxu0 0.0
    %1245 = vmatpush.msra.mxu0 0.0
    %1246 = vmatpush.msra.mxu0 0.0
    %1247 = vmatpush.msra.mxu0 0.0
    %1248 = vmatpush.msra.mxu0 %v1124
    %1249 = vmatpush.msra.mxu0 %v1122
    %1250 = vmatpush.msra.mxu0 %v1120
    %1251 = vmatpush.msra.mxu0 %v1118
    %1252 = vmatpush.msra.mxu0 %v1116
    %1253 = vmatpush.msra.mxu0 %v1114
    %1254 = vmatpush.msra.mxu0 %v1112
    %1255 = vmatpush.msra.mxu0 %v1110
    %1256 = vmatmul.f32.gmra.mxu0 %v259
    %v1257 = vpop.f32.mrf.mxu0
    %v1258 = vadd.f32 0.0, %v1257
    %1259 = vdwg.mxu0
    %1260 = vmatpush.msra.mxu0 0.0
    %1261 = vmatpush.msra.mxu0 0.0
    %1262 = vmatpush.msra.mxu0 0.0
    %1263 = vmatpush.msra.mxu0 0.0
    %1264 = vmatpush.msra.mxu0 0.0
    %1265 = vmatpush.msra.mxu0 0.0
    %1266 = vmatpush.msra.mxu0 0.0
    %1267 = vmatpush.msra.mxu0 0.0
    %1268 = vmatpush.msra.mxu0 %v1125
    %1269 = vmatpush.msra.mxu0 %v1123
    %1270 = vmatpush.msra.mxu0 %v1121
    %1271 = vmatpush.msra.mxu0 %v1119
    %1272 = vmatpush.msra.mxu0 %v1117
    %1273 = vmatpush.msra.mxu0 %v1115
    %1274 = vmatpush.msra.mxu0 %v1113
    %1275 = vmatpush.msra.mxu0 %v1111
    %1276 = vmatmul.f32.gmra.mxu0 %v259
    %v1277 = vpop.f32.mrf.mxu0
    %v1278 = vadd.f32 0.0, %v1277
    %1279 = vdwg.mxu0
    %v1280 = vadd.f32 %v1238, %v1258
    %v1281 = vadd.f32 %v1239, %v1278
    %v1282 = vxor.u32 %v1280, 2147483648
    %v1283 = vxor.u32 %v1281, 2147483648
    %v1284 = vmul.f32 %v1282, 1.442695
    %v1285 = vpow.pop %v1284
    %v1286 = vmul.f32 %v1283, 1.442695
    %v1287 = vpow.pop %v1286
    %v1288 = vadd.f32 %v1285, 1.0
    %v1289 = vadd.f32 %v1287, 1.0
    %v1290 = vrcp.pop %v1288
    %v1291 = vmul.f32 %v1288, %v1290
    %v1292 = vsub.f32 1.0, %v1291
    %v1293 = vmul.f32 %v1290, %v1292
    %v1294 = vadd.f32 %v1290, %v1293
    %vm1295 = vweird.f32 %v1288
    %vm1296 = vweird.f32 %v1290
    %vm1297 = vmor %vm1295, %vm1296
    %v1298 = vsel %vm1297, %v1290, %v1294
    %v1299 = vand.u32 2147483647, %v1288
    %vm1300 = vcmp.eq.f32.partialorder %v1299, 8.507059e+37
    %v1301 = vand.u32 %v1288, 2147483648
    %v1302 = vor.u32 1.1754944e-38, %v1301
    %v1303 = vsel %vm1300, %v1302, %v1298
    %v1304 = vmul.f32 1.0, %v1303
    %v1305 = vrcp.pop %v1289
    %v1306 = vmul.f32 %v1289, %v1305
    %v1307 = vsub.f32 1.0, %v1306
    %v1308 = vmul.f32 %v1305, %v1307
    %v1309 = vadd.f32 %v1305, %v1308
    %vm1310 = vweird.f32 %v1289
    %vm1311 = vweird.f32 %v1305
    %vm1312 = vmor %vm1310, %vm1311
    %v1313 = vsel %vm1312, %v1305, %v1309
    %v1314 = vand.u32 2147483647, %v1289
    %vm1315 = vcmp.eq.f32.partialorder %v1314, 8.507059e+37
    %v1316 = vand.u32 %v1289, 2147483648
    %v1317 = vor.u32 1.1754944e-38, %v1316
    %v1318 = vsel %vm1315, %v1317, %v1313
    %v1319 = vmul.f32 1.0, %v1318
    %v1320 = vtanh.pop %v1281
    %v1321 = vmul.f32 %v1304, 0.0
    %1323 = vrot.lane.b32.xlu0 %v1320, 64
    %v1324 = vpop.permute.xlu0 %1323
    %v1326 = vmul.f32 %v1304, %v1324
    %1328 = vrot.lane.b32.xlu0 %v1326, 64
    %v1329 = vpop.permute.xlu0 %1328
    %v1331 = vadd.f32 %v1321, %v1329
    %v1332 = vtanh.pop %v1331
    %1334 = vrot.lane.b32.xlu0 %v1332, 64
    %v1335 = vpop.permute.xlu0 %1334
    %v1337 = vmul.f32 %v1319, %v1335
    %v1338 = vadd.f32 %v1337, 0.0
    %v1339 = vsel %vm111, %v1177, %v1192
    %v1340 = vsel %vm112, %v1218, %v1233
    %v1342 = vsel %vm257, %v1337, 0
    %1344 = vmatpush.msra.mxu0 0.0
    %1345 = vmatpush.msra.mxu0 0.0
    %1346 = vmatpush.msra.mxu0 0.0
    %1347 = vmatpush.msra.mxu0 0.0
    %1348 = vmatpush.msra.mxu0 0.0
    %1349 = vmatpush.msra.mxu0 0.0
    %1350 = vmatpush.msra.mxu0 0.0
    %1351 = vmatpush.msra.mxu0 0.0
    %1352 = vmatpush.msra.mxu0 %v1124
    %1353 = vmatpush.msra.mxu0 %v1122
    %1354 = vmatpush.msra.mxu0 %v1120
    %1355 = vmatpush.msra.mxu0 %v1118
    %1356 = vmatpush.msra.mxu0 %v1116
    %1357 = vmatpush.msra.mxu0 %v1114
    %1358 = vmatpush.msra.mxu0 %v1112
    %1359 = vmatpush.msra.mxu0 %v1110
    %1360 = vmatmul.f32.gmra.mxu0 %v1342
    %v1361 = vpop.f32.mrf.mxu0
    %v1362 = vadd.f32 0.0, %v1361
    %1363 = vdwg.mxu0
    %1364 = vmatpush.msra.mxu0 0.0
    %1365 = vmatpush.msra.mxu0 0.0
    %1366 = vmatpush.msra.mxu0 0.0
    %1367 = vmatpush.msra.mxu0 0.0
    %1368 = vmatpush.msra.mxu0 0.0
    %1369 = vmatpush.msra.mxu0 0.0
    %1370 = vmatpush.msra.mxu0 0.0
    %1371 = vmatpush.msra.mxu0 0.0
    %1372 = vmatpush.msra.mxu0 %v1125
    %1373 = vmatpush.msra.mxu0 %v1123
    %1374 = vmatpush.msra.mxu0 %v1121
    %1375 = vmatpush.msra.mxu0 %v1119
    %1376 = vmatpush.msra.mxu0 %v1117
    %1377 = vmatpush.msra.mxu0 %v1115
    %1378 = vmatpush.msra.mxu0 %v1113
    %1379 = vmatpush.msra.mxu0 %v1111
    %1380 = vmatmul.f32.gmra.mxu0 %v1342
    %v1381 = vpop.f32.mrf.mxu0
    %v1382 = vadd.f32 0.0, %v1381
    %1383 = vdwg.mxu0
    %v1384 = vadd.f32 %v1339, %v1362
    %v1385 = vadd.f32 %v1340, %v1382
    %v1386 = vxor.u32 %v1384, 2147483648
    %v1387 = vxor.u32 %v1385, 2147483648
    %v1388 = vmul.f32 %v1386, 1.442695
    %v1389 = vpow.pop %v1388
    %v1390 = vmul.f32 %v1387, 1.442695
    %v1391 = vpow.pop %v1390
    %v1392 = vadd.f32 %v1389, 1.0
    %v1393 = vadd.f32 %v1391, 1.0
    %v1394 = vrcp.pop %v1392
    %v1395 = vmul.f32 %v1392, %v1394
    %v1396 = vsub.f32 1.0, %v1395
    %v1397 = vmul.f32 %v1394, %v1396
    %v1398 = vadd.f32 %v1394, %v1397
    %vm1399 = vweird.f32 %v1392
    %vm1400 = vweird.f32 %v1394
    %vm1401 = vmor %vm1399, %vm1400
    %v1402 = vsel %vm1401, %v1394, %v1398
    %v1403 = vand.u32 2147483647, %v1392
    %vm1404 = vcmp.eq.f32.partialorder %v1403, 8.507059e+37
    %v1405 = vand.u32 %v1392, 2147483648
    %v1406 = vor.u32 1.1754944e-38, %v1405
    %v1407 = vsel %vm1404, %v1406, %v1402
    %v1408 = vmul.f32 1.0, %v1407
    %v1409 = vrcp.pop %v1393
    %v1410 = vmul.f32 %v1393, %v1409
    %v1411 = vsub.f32 1.0, %v1410
    %v1412 = vmul.f32 %v1409, %v1411
    %v1413 = vadd.f32 %v1409, %v1412
    %vm1414 = vweird.f32 %v1393
    %vm1415 = vweird.f32 %v1409
    %vm1416 = vmor %vm1414, %vm1415
    %v1417 = vsel %vm1416, %v1409, %v1413
    %v1418 = vand.u32 2147483647, %v1393
    %vm1419 = vcmp.eq.f32.partialorder %v1418, 8.507059e+37
    %v1420 = vand.u32 %v1393, 2147483648
    %v1421 = vor.u32 1.1754944e-38, %v1420
    %v1422 = vsel %vm1419, %v1421, %v1417
    %v1423 = vmul.f32 1.0, %v1422
    %v1424 = vtanh.pop %v1385
    %v1425 = vmul.f32 %v1408, %v1331
    %1427 = vrot.lane.b32.xlu0 %v1424, 64
    %v1428 = vpop.permute.xlu0 %1427
    %v1430 = vmul.f32 %v1408, %v1428
    %1432 = vrot.lane.b32.xlu0 %v1430, 64
    %v1433 = vpop.permute.xlu0 %1432
    %v1435 = vadd.f32 %v1425, %v1433
    %v1436 = vtanh.pop %v1435
    %1438 = vrot.lane.b32.xlu0 %v1436, 64
    %v1439 = vpop.permute.xlu0 %1438
    %v1441 = vmul.f32 %v1423, %v1439
    %v1442 = vadd.f32 %v1338, %v1441
    %v1443 = vsel %vm111, %v1180, %v1189
    %v1444 = vsel %vm112, %v1221, %v1230
    %v1446 = vsel %vm257, %v1441, 0
    %1448 = vmatpush.msra.mxu0 0.0
    %1449 = vmatpush.msra.mxu0 0.0
    %1450 = vmatpush.msra.mxu0 0.0
    %1451 = vmatpush.msra.mxu0 0.0
    %1452 = vmatpush.msra.mxu0 0.0
    %1453 = vmatpush.msra.mxu0 0.0
    %1454 = vmatpush.msra.mxu0 0.0
    %1455 = vmatpush.msra.mxu0 0.0
    %1456 = vmatpush.msra.mxu0 %v1124
    %1457 = vmatpush.msra.mxu0 %v1122
    %1458 = vmatpush.msra.mxu0 %v1120
    %1459 = vmatpush.msra.mxu0 %v1118
    %1460 = vmatpush.msra.mxu0 %v1116
    %1461 = vmatpush.msra.mxu0 %v1114
    %1462 = vmatpush.msra.mxu0 %v1112
    %1463 = vmatpush.msra.mxu0 %v1110
    %1464 = vmatmul.f32.gmra.mxu0 %v1446
    %v1465 = vpop.f32.mrf.mxu0
    %v1466 = vadd.f32 0.0, %v1465
    %1467 = vdwg.mxu0
    %1468 = vmatpush.msra.mxu0 0.0
    %1469 = vmatpush.msra.mxu0 0.0
    %1470 = vmatpush.msra.mxu0 0.0
    %1471 = vmatpush.msra.mxu0 0.0
    %1472 = vmatpush.msra.mxu0 0.0
    %1473 = vmatpush.msra.mxu0 0.0
    %1474 = vmatpush.msra.mxu0 0.0
    %1475 = vmatpush.msra.mxu0 0.0
    %1476 = vmatpush.msra.mxu0 %v1125
    %1477 = vmatpush.msra.mxu0 %v1123
    %1478 = vmatpush.msra.mxu0 %v1121
    %1479 = vmatpush.msra.mxu0 %v1119
    %1480 = vmatpush.msra.mxu0 %v1117
    %1481 = vmatpush.msra.mxu0 %v1115
    %1482 = vmatpush.msra.mxu0 %v1113
    %1483 = vmatpush.msra.mxu0 %v1111
    %1484 = vmatmul.f32.gmra.mxu0 %v1446
    %v1485 = vpop.f32.mrf.mxu0
    %v1486 = vadd.f32 0.0, %v1485
    %1487 = vdwg.mxu0
    %v1488 = vadd.f32 %v1443, %v1466
    %v1489 = vadd.f32 %v1444, %v1486
    %v1490 = vxor.u32 %v1488, 2147483648
    %v1491 = vxor.u32 %v1489, 2147483648
    %v1492 = vmul.f32 %v1490, 1.442695
    %v1493 = vpow.pop %v1492
    %v1494 = vmul.f32 %v1491, 1.442695
    %v1495 = vpow.pop %v1494
    %v1496 = vadd.f32 %v1493, 1.0
    %v1497 = vadd.f32 %v1495, 1.0
    %v1498 = vrcp.pop %v1496
    %v1499 = vmul.f32 %v1496, %v1498
    %v1500 = vsub.f32 1.0, %v1499
    %v1501 = vmul.f32 %v1498, %v1500
    %v1502 = vadd.f32 %v1498, %v1501
    %vm1503 = vweird.f32 %v1496
    %vm1504 = vweird.f32 %v1498
    %vm1505 = vmor %vm1503, %vm1504
    %v1506 = vsel %vm1505, %v1498, %v1502
    %v1507 = vand.u32 2147483647, %v1496
    %vm1508 = vcmp.eq.f32.partialorder %v1507, 8.507059e+37
    %v1509 = vand.u32 %v1496, 2147483648
    %v1510 = vor.u32 1.1754944e-38, %v1509
    %v1511 = vsel %vm1508, %v1510, %v1506
    %v1512 = vmul.f32 1.0, %v1511
    %v1513 = vrcp.pop %v1497
    %v1514 = vmul.f32 %v1497, %v1513
    %v1515 = vsub.f32 1.0, %v1514
    %v1516 = vmul.f32 %v1513, %v1515
    %v1517 = vadd.f32 %v1513, %v1516
    %vm1518 = vweird.f32 %v1497
    %vm1519 = vweird.f32 %v1513
    %vm1520 = vmor %vm1518, %vm1519
    %v1521 = vsel %vm1520, %v1513, %v1517
    %v1522 = vand.u32 2147483647, %v1497
    %vm1523 = vcmp.eq.f32.partialorder %v1522, 8.507059e+37
    %v1524 = vand.u32 %v1497, 2147483648
    %v1525 = vor.u32 1.1754944e-38, %v1524
    %v1526 = vsel %vm1523, %v1525, %v1521
    %v1527 = vmul.f32 1.0, %v1526
    %v1528 = vtanh.pop %v1489
    %v1529 = vmul.f32 %v1512, %v1435
    %1531 = vrot.lane.b32.xlu0 %v1528, 64
    %v1532 = vpop.permute.xlu0 %1531
    %v1534 = vmul.f32 %v1512, %v1532
    %1536 = vrot.lane.b32.xlu0 %v1534, 64
    %v1537 = vpop.permute.xlu0 %1536
    %v1539 = vadd.f32 %v1529, %v1537
    %v1540 = vtanh.pop %v1539
    %1542 = vrot.lane.b32.xlu0 %v1540, 64
    %v1543 = vpop.permute.xlu0 %1542
    %v1545 = vmul.f32 %v1527, %v1543
    %v1546 = vadd.f32 %v1442, %v1545
    %v1547 = vsel %vm111, %v1183, %v1186
    %v1548 = vsel %vm112, %v1224, %v1227
    %v1550 = vsel %vm257, %v1545, 0
    %1552 = vmatpush.msra.mxu0 0.0
    %1553 = vmatpush.msra.mxu0 0.0
    %1554 = vmatpush.msra.mxu0 0.0
    %1555 = vmatpush.msra.mxu0 0.0
    %1556 = vmatpush.msra.mxu0 0.0
    %1557 = vmatpush.msra.mxu0 0.0
    %1558 = vmatpush.msra.mxu0 0.0
    %1559 = vmatpush.msra.mxu0 0.0
    %1560 = vmatpush.msra.mxu0 %v1124
    %1561 = vmatpush.msra.mxu0 %v1122
    %1562 = vmatpush.msra.mxu0 %v1120
    %1563 = vmatpush.msra.mxu0 %v1118
    %1564 = vmatpush.msra.mxu0 %v1116
    %1565 = vmatpush.msra.mxu0 %v1114
    %1566 = vmatpush.msra.mxu0 %v1112
    %1567 = vmatpush.msra.mxu0 %v1110
    %1568 = vmatmul.f32.gmra.mxu0 %v1550
    %v1569 = vpop.f32.mrf.mxu0
    %v1570 = vadd.f32 0.0, %v1569
    %1571 = vdwg.mxu0
    %1572 = vmatpush.msra.mxu0 0.0
    %1573 = vmatpush.msra.mxu0 0.0
    %1574 = vmatpush.msra.mxu0 0.0
    %1575 = vmatpush.msra.mxu0 0.0
    %1576 = vmatpush.msra.mxu0 0.0
    %1577 = vmatpush.msra.mxu0 0.0
    %1578 = vmatpush.msra.mxu0 0.0
    %1579 = vmatpush.msra.mxu0 0.0
    %1580 = vmatpush.msra.mxu0 %v1125
    %1581 = vmatpush.msra.mxu0 %v1123
    %1582 = vmatpush.msra.mxu0 %v1121
    %1583 = vmatpush.msra.mxu0 %v1119
    %1584 = vmatpush.msra.mxu0 %v1117
    %1585 = vmatpush.msra.mxu0 %v1115
    %1586 = vmatpush.msra.mxu0 %v1113
    %1587 = vmatpush.msra.mxu0 %v1111
    %1588 = vmatmul.f32.gmra.mxu0 %v1550
    %v1589 = vpop.f32.mrf.mxu0
    %v1590 = vadd.f32 0.0, %v1589
    %1591 = vdwg.mxu0
    %v1592 = vadd.f32 %v1547, %v1570
    %v1593 = vadd.f32 %v1548, %v1590
    %v1594 = vxor.u32 %v1592, 2147483648
    %v1595 = vxor.u32 %v1593, 2147483648
    %v1596 = vmul.f32 %v1594, 1.442695
    %v1597 = vpow.pop %v1596
    %v1598 = vmul.f32 %v1595, 1.442695
    %v1599 = vpow.pop %v1598
    %v1600 = vadd.f32 %v1597, 1.0
    %v1601 = vadd.f32 %v1599, 1.0
    %v1602 = vrcp.pop %v1600
    %v1603 = vmul.f32 %v1600, %v1602
    %v1604 = vsub.f32 1.0, %v1603
    %v1605 = vmul.f32 %v1602, %v1604
    %v1606 = vadd.f32 %v1602, %v1605
    %vm1607 = vweird.f32 %v1600
    %vm1608 = vweird.f32 %v1602
    %vm1609 = vmor %vm1607, %vm1608
    %v1610 = vsel %vm1609, %v1602, %v1606
    %v1611 = vand.u32 2147483647, %v1600
    %vm1612 = vcmp.eq.f32.partialorder %v1611, 8.507059e+37
    %v1613 = vand.u32 %v1600, 2147483648
    %v1614 = vor.u32 1.1754944e-38, %v1613
    %v1615 = vsel %vm1612, %v1614, %v1610
    %v1616 = vmul.f32 1.0, %v1615
    %v1617 = vrcp.pop %v1601
    %v1618 = vmul.f32 %v1601, %v1617
    %v1619 = vsub.f32 1.0, %v1618
    %v1620 = vmul.f32 %v1617, %v1619
    %v1621 = vadd.f32 %v1617, %v1620
    %vm1622 = vweird.f32 %v1601
    %vm1623 = vweird.f32 %v1617
    %vm1624 = vmor %vm1622, %vm1623
    %v1625 = vsel %vm1624, %v1617, %v1621
    %v1626 = vand.u32 2147483647, %v1601
    %vm1627 = vcmp.eq.f32.partialorder %v1626, 8.507059e+37
    %v1628 = vand.u32 %v1601, 2147483648
    %v1629 = vor.u32 1.1754944e-38, %v1628
    %v1630 = vsel %vm1627, %v1629, %v1625
    %v1631 = vmul.f32 1.0, %v1630
    %v1632 = vtanh.pop %v1593
    %v1633 = vmul.f32 %v1616, %v1539
    %1635 = vrot.lane.b32.xlu0 %v1632, 64
    %v1636 = vpop.permute.xlu0 %1635
    %v1638 = vmul.f32 %v1616, %v1636
    %1640 = vrot.lane.b32.xlu0 %v1638, 64
    %v1641 = vpop.permute.xlu0 %1640
    %v1643 = vadd.f32 %v1633, %v1641
    %v1644 = vtanh.pop %v1643
    %1646 = vrot.lane.b32.xlu0 %v1644, 64
    %v1647 = vpop.permute.xlu0 %1646
    %v1649 = vmul.f32 %v1631, %v1647
    %v1650 = vadd.f32 %v1546, %v1649
    %v1651 = vsel %vm111, %v1186, %v1183
    %v1652 = vsel %vm112, %v1227, %v1224
    %v1654 = vsel %vm257, %v1649, 0
    %1656 = vmatpush.msra.mxu0 0.0
    %1657 = vmatpush.msra.mxu0 0.0
    %1658 = vmatpush.msra.mxu0 0.0
    %1659 = vmatpush.msra.mxu0 0.0
    %1660 = vmatpush.msra.mxu0 0.0
    %1661 = vmatpush.msra.mxu0 0.0
    %1662 = vmatpush.msra.mxu0 0.0
    %1663 = vmatpush.msra.mxu0 0.0
    %1664 = vmatpush.msra.mxu0 %v1124
    %1665 = vmatpush.msra.mxu0 %v1122
    %1666 = vmatpush.msra.mxu0 %v1120
    %1667 = vmatpush.msra.mxu0 %v1118
    %1668 = vmatpush.msra.mxu0 %v1116
    %1669 = vmatpush.msra.mxu0 %v1114
    %1670 = vmatpush.msra.mxu0 %v1112
    %1671 = vmatpush.msra.mxu0 %v1110
    %1672 = vmatmul.f32.gmra.mxu0 %v1654
    %v1673 = vpop.f32.mrf.mxu0
    %v1674 = vadd.f32 0.0, %v1673
    %1675 = vdwg.mxu0
    %1676 = vmatpush.msra.mxu0 0.0
    %1677 = vmatpush.msra.mxu0 0.0
    %1678 = vmatpush.msra.mxu0 0.0
    %1679 = vmatpush.msra.mxu0 0.0
    %1680 = vmatpush.msra.mxu0 0.0
    %1681 = vmatpush.msra.mxu0 0.0
    %1682 = vmatpush.msra.mxu0 0.0
    %1683 = vmatpush.msra.mxu0 0.0
    %1684 = vmatpush.msra.mxu0 %v1125
    %1685 = vmatpush.msra.mxu0 %v1123
    %1686 = vmatpush.msra.mxu0 %v1121
    %1687 = vmatpush.msra.mxu0 %v1119
    %1688 = vmatpush.msra.mxu0 %v1117
    %1689 = vmatpush.msra.mxu0 %v1115
    %1690 = vmatpush.msra.mxu0 %v1113
    %1691 = vmatpush.msra.mxu0 %v1111
    %1692 = vmatmul.f32.gmra.mxu0 %v1654
    %v1693 = vpop.f32.mrf.mxu0
    %v1694 = vadd.f32 0.0, %v1693
    %1695 = vdwg.mxu0
    %v1696 = vadd.f32 %v1651, %v1674
    %v1697 = vadd.f32 %v1652, %v1694
    %v1698 = vxor.u32 %v1696, 2147483648
    %v1699 = vxor.u32 %v1697, 2147483648
    %v1700 = vmul.f32 %v1698, 1.442695
    %v1701 = vpow.pop %v1700
    %v1702 = vmul.f32 %v1699, 1.442695
    %v1703 = vpow.pop %v1702
    %v1704 = vadd.f32 %v1701, 1.0
    %v1705 = vadd.f32 %v1703, 1.0
    %v1706 = vrcp.pop %v1704
    %v1707 = vmul.f32 %v1704, %v1706
    %v1708 = vsub.f32 1.0, %v1707
    %v1709 = vmul.f32 %v1706, %v1708
    %v1710 = vadd.f32 %v1706, %v1709
    %vm1711 = vweird.f32 %v1704
    %vm1712 = vweird.f32 %v1706
    %vm1713 = vmor %vm1711, %vm1712
    %v1714 = vsel %vm1713, %v1706, %v1710
    %v1715 = vand.u32 2147483647, %v1704
    %vm1716 = vcmp.eq.f32.partialorder %v1715, 8.507059e+37
    %v1717 = vand.u32 %v1704, 2147483648
    %v1718 = vor.u32 1.1754944e-38, %v1717
    %v1719 = vsel %vm1716, %v1718, %v1714
    %v1720 = vmul.f32 1.0, %v1719
    %v1721 = vrcp.pop %v1705
    %v1722 = vmul.f32 %v1705, %v1721
    %v1723 = vsub.f32 1.0, %v1722
    %v1724 = vmul.f32 %v1721, %v1723
    %v1725 = vadd.f32 %v1721, %v1724
    %vm1726 = vweird.f32 %v1705
    %vm1727 = vweird.f32 %v1721
    %vm1728 = vmor %vm1726, %vm1727
    %v1729 = vsel %vm1728, %v1721, %v1725
    %v1730 = vand.u32 2147483647, %v1705
    %vm1731 = vcmp.eq.f32.partialorder %v1730, 8.507059e+37
    %v1732 = vand.u32 %v1705, 2147483648
    %v1733 = vor.u32 1.1754944e-38, %v1732
    %v1734 = vsel %vm1731, %v1733, %v1729
    %v1735 = vmul.f32 1.0, %v1734
    %v1736 = vtanh.pop %v1697
    %v1737 = vmul.f32 %v1720, %v1643
    %1739 = vrot.lane.b32.xlu0 %v1736, 64
    %v1740 = vpop.permute.xlu0 %1739
    %v1742 = vmul.f32 %v1720, %v1740
    %1744 = vrot.lane.b32.xlu0 %v1742, 64
    %v1745 = vpop.permute.xlu0 %1744
    %v1747 = vadd.f32 %v1737, %v1745
    %v1748 = vtanh.pop %v1747
    %1750 = vrot.lane.b32.xlu0 %v1748, 64
    %v1751 = vpop.permute.xlu0 %1750
    %v1753 = vmul.f32 %v1735, %v1751
    %v1754 = vadd.f32 %v1650, %v1753
    %v1755 = vsel %vm111, %v1189, %v1180
    %v1756 = vsel %vm112, %v1230, %v1221
    %v1758 = vsel %vm257, %v1753, 0
    %1760 = vmatpush.msra.mxu0 0.0
    %1761 = vmatpush.msra.mxu0 0.0
    %1762 = vmatpush.msra.mxu0 0.0
    %1763 = vmatpush.msra.mxu0 0.0
    %1764 = vmatpush.msra.mxu0 0.0
    %1765 = vmatpush.msra.mxu0 0.0
    %1766 = vmatpush.msra.mxu0 0.0
    %1767 = vmatpush.msra.mxu0 0.0
    %1768 = vmatpush.msra.mxu0 %v1124
    %1769 = vmatpush.msra.mxu0 %v1122
    %1770 = vmatpush.msra.mxu0 %v1120
    %1771 = vmatpush.msra.mxu0 %v1118
    %1772 = vmatpush.msra.mxu0 %v1116
    %1773 = vmatpush.msra.mxu0 %v1114
    %1774 = vmatpush.msra.mxu0 %v1112
    %1775 = vmatpush.msra.mxu0 %v1110
    %1776 = vmatmul.f32.gmra.mxu0 %v1758
    %v1777 = vpop.f32.mrf.mxu0
    %v1778 = vadd.f32 0.0, %v1777
    %1779 = vdwg.mxu0
    %1780 = vmatpush.msra.mxu0 0.0
    %1781 = vmatpush.msra.mxu0 0.0
    %1782 = vmatpush.msra.mxu0 0.0
    %1783 = vmatpush.msra.mxu0 0.0
    %1784 = vmatpush.msra.mxu0 0.0
    %1785 = vmatpush.msra.mxu0 0.0
    %1786 = vmatpush.msra.mxu0 0.0
    %1787 = vmatpush.msra.mxu0 0.0
    %1788 = vmatpush.msra.mxu0 %v1125
    %1789 = vmatpush.msra.mxu0 %v1123
    %1790 = vmatpush.msra.mxu0 %v1121
    %1791 = vmatpush.msra.mxu0 %v1119
    %1792 = vmatpush.msra.mxu0 %v1117
    %1793 = vmatpush.msra.mxu0 %v1115
    %1794 = vmatpush.msra.mxu0 %v1113
    %1795 = vmatpush.msra.mxu0 %v1111
    %1796 = vmatmul.f32.gmra.mxu0 %v1758
    %v1797 = vpop.f32.mrf.mxu0
    %v1798 = vadd.f32 0.0, %v1797
    %1799 = vdwg.mxu0
    %v1800 = vadd.f32 %v1755, %v1778
    %v1801 = vadd.f32 %v1756, %v1798
    %v1802 = vxor.u32 %v1800, 2147483648
    %v1803 = vxor.u32 %v1801, 2147483648
    %v1804 = vmul.f32 %v1802, 1.442695
    %v1805 = vpow.pop %v1804
    %v1806 = vmul.f32 %v1803, 1.442695
    %v1807 = vpow.pop %v1806
    %v1808 = vadd.f32 %v1805, 1.0
    %v1809 = vadd.f32 %v1807, 1.0
    %v1810 = vrcp.pop %v1808
    %v1811 = vmul.f32 %v1808, %v1810
    %v1812 = vsub.f32 1.0, %v1811
    %v1813 = vmul.f32 %v1810, %v1812
    %v1814 = vadd.f32 %v1810, %v1813
    %vm1815 = vweird.f32 %v1808
    %vm1816 = vweird.f32 %v1810
    %vm1817 = vmor %vm1815, %vm1816
    %v1818 = vsel %vm1817, %v1810, %v1814
    %v1819 = vand.u32 2147483647, %v1808
    %vm1820 = vcmp.eq.f32.partialorder %v1819, 8.507059e+37
    %v1821 = vand.u32 %v1808, 2147483648
    %v1822 = vor.u32 1.1754944e-38, %v1821
    %v1823 = vsel %vm1820, %v1822, %v1818
    %v1824 = vmul.f32 1.0, %v1823
    %v1825 = vrcp.pop %v1809
    %v1826 = vmul.f32 %v1809, %v1825
    %v1827 = vsub.f32 1.0, %v1826
    %v1828 = vmul.f32 %v1825, %v1827
    %v1829 = vadd.f32 %v1825, %v1828
    %vm1830 = vweird.f32 %v1809
    %vm1831 = vweird.f32 %v1825
    %vm1832 = vmor %vm1830, %vm1831
    %v1833 = vsel %vm1832, %v1825, %v1829
    %v1834 = vand.u32 2147483647, %v1809
    %vm1835 = vcmp.eq.f32.partialorder %v1834, 8.507059e+37
    %v1836 = vand.u32 %v1809, 2147483648
    %v1837 = vor.u32 1.1754944e-38, %v1836
    %v1838 = vsel %vm1835, %v1837, %v1833
    %v1839 = vmul.f32 1.0, %v1838
    %v1840 = vtanh.pop %v1801
    %v1841 = vmul.f32 %v1824, %v1747
    %1843 = vrot.lane.b32.xlu0 %v1840, 64
    %v1844 = vpop.permute.xlu0 %1843
    %v1846 = vmul.f32 %v1824, %v1844
    %1848 = vrot.lane.b32.xlu0 %v1846, 64
    %v1849 = vpop.permute.xlu0 %1848
    %v1851 = vadd.f32 %v1841, %v1849
    %v1852 = vtanh.pop %v1851
    %1854 = vrot.lane.b32.xlu0 %v1852, 64
    %v1855 = vpop.permute.xlu0 %1854
    %v1857 = vmul.f32 %v1839, %v1855
    %v1858 = vadd.f32 %v1754, %v1857
    %v1859 = vsel %vm111, %v1192, %v1177
    %v1860 = vsel %vm112, %v1233, %v1218
    %v1862 = vsel %vm257, %v1857, 0
    %1864 = vmatpush.msra.mxu0 0.0
    %1865 = vmatpush.msra.mxu0 0.0
    %1866 = vmatpush.msra.mxu0 0.0
    %1867 = vmatpush.msra.mxu0 0.0
    %1868 = vmatpush.msra.mxu0 0.0
    %1869 = vmatpush.msra.mxu0 0.0
    %1870 = vmatpush.msra.mxu0 0.0
    %1871 = vmatpush.msra.mxu0 0.0
    %1872 = vmatpush.msra.mxu0 %v1124
    %1873 = vmatpush.msra.mxu0 %v1122
    %1874 = vmatpush.msra.mxu0 %v1120
    %1875 = vmatpush.msra.mxu0 %v1118
    %1876 = vmatpush.msra.mxu0 %v1116
    %1877 = vmatpush.msra.mxu0 %v1114
    %1878 = vmatpush.msra.mxu0 %v1112
    %1879 = vmatpush.msra.mxu0 %v1110
    %1880 = vmatmul.f32.gmra.mxu0 %v1862
    %v1881 = vpop.f32.mrf.mxu0
    %v1882 = vadd.f32 0.0, %v1881
    %1883 = vdwg.mxu0
    %1884 = vmatpush.msra.mxu0 0.0
    %1885 = vmatpush.msra.mxu0 0.0
    %1886 = vmatpush.msra.mxu0 0.0
    %1887 = vmatpush.msra.mxu0 0.0
    %1888 = vmatpush.msra.mxu0 0.0
    %1889 = vmatpush.msra.mxu0 0.0
    %1890 = vmatpush.msra.mxu0 0.0
    %1891 = vmatpush.msra.mxu0 0.0
    %1892 = vmatpush.msra.mxu0 %v1125
    %1893 = vmatpush.msra.mxu0 %v1123
    %1894 = vmatpush.msra.mxu0 %v1121
    %1895 = vmatpush.msra.mxu0 %v1119
    %1896 = vmatpush.msra.mxu0 %v1117
    %1897 = vmatpush.msra.mxu0 %v1115
    %1898 = vmatpush.msra.mxu0 %v1113
    %1899 = vmatpush.msra.mxu0 %v1111
    %1900 = vmatmul.f32.gmra.mxu0 %v1862
    %v1901 = vpop.f32.mrf.mxu0
    %v1902 = vadd.f32 0.0, %v1901
    %1903 = vdwg.mxu0
    %v1904 = vadd.f32 %v1859, %v1882
    %v1905 = vadd.f32 %v1860, %v1902
    %v1906 = vxor.u32 %v1904, 2147483648
    %v1907 = vxor.u32 %v1905, 2147483648
    %v1908 = vmul.f32 %v1906, 1.442695
    %v1909 = vpow.pop %v1908
    %v1910 = vmul.f32 %v1907, 1.442695
    %v1911 = vpow.pop %v1910
    %v1912 = vadd.f32 %v1909, 1.0
    %v1913 = vadd.f32 %v1911, 1.0
    %v1914 = vrcp.pop %v1912
    %v1915 = vmul.f32 %v1912, %v1914
    %v1916 = vsub.f32 1.0, %v1915
    %v1917 = vmul.f32 %v1914, %v1916
    %v1918 = vadd.f32 %v1914, %v1917
    %vm1919 = vweird.f32 %v1912
    %vm1920 = vweird.f32 %v1914
    %vm1921 = vmor %vm1919, %vm1920
    %v1922 = vsel %vm1921, %v1914, %v1918
    %v1923 = vand.u32 2147483647, %v1912
    %vm1924 = vcmp.eq.f32.partialorder %v1923, 8.507059e+37
    %v1925 = vand.u32 %v1912, 2147483648
    %v1926 = vor.u32 1.1754944e-38, %v1925
    %v1927 = vsel %vm1924, %v1926, %v1922
    %v1928 = vmul.f32 1.0, %v1927
    %v1929 = vrcp.pop %v1913
    %v1930 = vmul.f32 %v1913, %v1929
    %v1931 = vsub.f32 1.0, %v1930
    %v1932 = vmul.f32 %v1929, %v1931
    %v1933 = vadd.f32 %v1929, %v1932
    %vm1934 = vweird.f32 %v1913
    %vm1935 = vweird.f32 %v1929
    %vm1936 = vmor %vm1934, %vm1935
    %v1937 = vsel %vm1936, %v1929, %v1933
    %v1938 = vand.u32 2147483647, %v1913
    %vm1939 = vcmp.eq.f32.partialorder %v1938, 8.507059e+37
    %v1940 = vand.u32 %v1913, 2147483648
    %v1941 = vor.u32 1.1754944e-38, %v1940
    %v1942 = vsel %vm1939, %v1941, %v1937
    %v1943 = vmul.f32 1.0, %v1942
    %v1944 = vtanh.pop %v1905
    %v1945 = vmul.f32 %v1928, %v1851
    %1947 = vrot.lane.b32.xlu0 %v1944, 64
    %v1948 = vpop.permute.xlu0 %1947
    %v1950 = vmul.f32 %v1928, %v1948
    %1952 = vrot.lane.b32.xlu0 %v1950, 64
    %v1953 = vpop.permute.xlu0 %1952
    %v1955 = vadd.f32 %v1945, %v1953
    %v1956 = vtanh.pop %v1955
    %1958 = vrot.lane.b32.xlu0 %v1956, 64
    %v1959 = vpop.permute.xlu0 %1958
    %v1961 = vmul.f32 %v1943, %v1959
    %v1962 = vadd.f32 %v1858, %v1961
    %v1963 = vsel %vm111, %v1195, %v1174
    %v1964 = vsel %vm112, %v1236, %v1215
    %v1966 = vsel %vm257, %v1961, 0
    %1968 = vmatpush.msra.mxu0 0.0
    %1969 = vmatpush.msra.mxu0 0.0
    %1970 = vmatpush.msra.mxu0 0.0
    %1971 = vmatpush.msra.mxu0 0.0
    %1972 = vmatpush.msra.mxu0 0.0
    %1973 = vmatpush.msra.mxu0 0.0
    %1974 = vmatpush.msra.mxu0 0.0
    %1975 = vmatpush.msra.mxu0 0.0
    %1976 = vmatpush.msra.mxu0 %v1124
    %1977 = vmatpush.msra.mxu0 %v1122
    %1978 = vmatpush.msra.mxu0 %v1120
    %1979 = vmatpush.msra.mxu0 %v1118
    %1980 = vmatpush.msra.mxu0 %v1116
    %1981 = vmatpush.msra.mxu0 %v1114
    %1982 = vmatpush.msra.mxu0 %v1112
    %1983 = vmatpush.msra.mxu0 %v1110
    %1984 = vmatmul.f32.gmra.mxu0 %v1966
    %v1985 = vpop.f32.mrf.mxu0
    %v1986 = vadd.f32 0.0, %v1985
    %1987 = vdwg.mxu0
    %1988 = vmatpush.msra.mxu0 0.0
    %1989 = vmatpush.msra.mxu0 0.0
    %1990 = vmatpush.msra.mxu0 0.0
    %1991 = vmatpush.msra.mxu0 0.0
    %1992 = vmatpush.msra.mxu0 0.0
    %1993 = vmatpush.msra.mxu0 0.0
    %1994 = vmatpush.msra.mxu0 0.0
    %1995 = vmatpush.msra.mxu0 0.0
    %1996 = vmatpush.msra.mxu0 %v1125
    %1997 = vmatpush.msra.mxu0 %v1123
    %1998 = vmatpush.msra.mxu0 %v1121
    %1999 = vmatpush.msra.mxu0 %v1119
    %2000 = vmatpush.msra.mxu0 %v1117
    %2001 = vmatpush.msra.mxu0 %v1115
    %2002 = vmatpush.msra.mxu0 %v1113
    %2003 = vmatpush.msra.mxu0 %v1111
    %2004 = vmatmul.f32.gmra.mxu0 %v1966
    %v2005 = vpop.f32.mrf.mxu0
    %v2006 = vadd.f32 0.0, %v2005
    %2007 = vdwg.mxu0
    %v2008 = vadd.f32 %v1963, %v1986
    %v2009 = vadd.f32 %v1964, %v2006
    %v2010 = vxor.u32 %v2008, 2147483648
    %v2011 = vxor.u32 %v2009, 2147483648
    %v2012 = vmul.f32 %v2010, 1.442695
    %v2013 = vpow.pop %v2012
    %v2014 = vmul.f32 %v2011, 1.442695
    %v2015 = vpow.pop %v2014
    %v2016 = vadd.f32 %v2013, 1.0
    %v2017 = vadd.f32 %v2015, 1.0
    %v2018 = vrcp.pop %v2016
    %v2019 = vmul.f32 %v2016, %v2018
    %v2020 = vsub.f32 1.0, %v2019
    %v2021 = vmul.f32 %v2018, %v2020
    %v2022 = vadd.f32 %v2018, %v2021
    %vm2023 = vweird.f32 %v2016
    %vm2024 = vweird.f32 %v2018
    %vm2025 = vmor %vm2023, %vm2024
    %v2026 = vsel %vm2025, %v2018, %v2022
    %v2027 = vand.u32 2147483647, %v2016
    %vm2028 = vcmp.eq.f32.partialorder %v2027, 8.507059e+37
    %v2029 = vand.u32 %v2016, 2147483648
    %v2030 = vor.u32 1.1754944e-38, %v2029
    %v2031 = vsel %vm2028, %v2030, %v2026
    %v2032 = vmul.f32 1.0, %v2031
    %v2033 = vrcp.pop %v2017
    %v2034 = vmul.f32 %v2017, %v2033
    %v2035 = vsub.f32 1.0, %v2034
    %v2036 = vmul.f32 %v2033, %v2035
    %v2037 = vadd.f32 %v2033, %v2036
    %vm2038 = vweird.f32 %v2017
    %vm2039 = vweird.f32 %v2033
    %vm2040 = vmor %vm2038, %vm2039
    %v2041 = vsel %vm2040, %v2033, %v2037
    %v2042 = vand.u32 2147483647, %v2017
    %vm2043 = vcmp.eq.f32.partialorder %v2042, 8.507059e+37
    %v2044 = vand.u32 %v2017, 2147483648
    %v2045 = vor.u32 1.1754944e-38, %v2044
    %v2046 = vsel %vm2043, %v2045, %v2041
    %v2047 = vmul.f32 1.0, %v2046
    %v2048 = vtanh.pop %v2009
    %v2049 = vmul.f32 %v2032, %v1955
    %2051 = vrot.lane.b32.xlu0 %v2048, 64
    %v2052 = vpop.permute.xlu0 %2051
    %v2054 = vmul.f32 %v2032, %v2052
    %2056 = vrot.lane.b32.xlu0 %v2054, 64
    %v2057 = vpop.permute.xlu0 %2056
    %v2059 = vadd.f32 %v2049, %v2057
    %v2060 = vtanh.pop %v2059
    %2062 = vrot.lane.b32.xlu0 %v2060, 64
    %v2063 = vpop.permute.xlu0 %2062
    %v2065 = vmul.f32 %v2047, %v2063
    %v2066 = vadd.f32 %v1962, %v2065
    %v2067 = vmax.f32 %v2066, 0.0
    %v2068 = vld [vmem:[%s7] sm:$0xff]
    %v2069 = vld [vmem:[%s7 + $0x8] sm:$0xff]
    %v2070 = vld [vmem:[%s7 + $0x10] sm:$0xff]
    %v2071 = vld [vmem:[%s7 + $0x18] sm:$0xff]
    %v2072 = vld [vmem:[%s7 + $0x20] sm:$0xff]
    %v2073 = vld [vmem:[%s7 + $0x28] sm:$0xff]
    %v2074 = vld [vmem:[%s7 + $0x30] sm:$0xff]
    %v2075 = vld [vmem:[%s7 + $0x38] sm:$0xff]
    %v2076 = vld [vmem:[%s8] sm:$0x1]
    %v2078 = vperm.slane %v2076, 0
    %v2081 = vsel %vm257, %v2067, 0
    %2083 = vmatpush.msra.mxu0 0.0
    %2084 = vmatpush.msra.mxu0 0.0
    %2085 = vmatpush.msra.mxu0 0.0
    %2086 = vmatpush.msra.mxu0 0.0
    %2087 = vmatpush.msra.mxu0 0.0
    %2088 = vmatpush.msra.mxu0 0.0
    %2089 = vmatpush.msra.mxu0 0.0
    %2090 = vmatpush.msra.mxu0 0.0
    %2091 = vmatpush.msra.mxu0 %v2075
    %2092 = vmatpush.msra.mxu0 %v2074
    %2093 = vmatpush.msra.mxu0 %v2073
    %2094 = vmatpush.msra.mxu0 %v2072
    %2095 = vmatpush.msra.mxu0 %v2071
    %2096 = vmatpush.msra.mxu0 %v2070
    %2097 = vmatpush.msra.mxu0 %v2069
    %2098 = vmatpush.msra.mxu0 %v2068
    %2099 = vmatmul.f32.gmra.mxu0 %v2081
    %v2100 = vpop.f32.mrf.mxu0
    %v2101 = vadd.f32 %v2078, %v2100
    %2102 = vdwg.mxu0
    %vm2103 = vcmask 105472
    %2104 = vst.msk [vmem:[#allocation8] sm:$0xff] %vm2103, %v2101
    %s2105 = scalar_lea.vmem [#allocation9], 8
    %2106 = vst.msk [vmem:[%s2105] sm:$0xff] %vm257, %v2065
    %2108 = vrot.lane.b32.xlu0 %v2059, 64
    %v2109 = vpop.permute.xlu0 %2108
    %s2111 = scalar_lea.vmem [#allocation11], 8
    %2112 = vst.msk [vmem:[%s2111] sm:$0xff] %vm257, %v2109
    // Predicated region
    $region50: #{tpu_custom_call.1} parent=1 // pred_check
      _
    $region51: #{tpu_custom_call.1} parent=1 // pred_check_branch
      %2114 = sbr.rel (0) target = $region53
    $region52: #{tpu_custom_call.1} parent=1 // pred_region
      %2116 = vsyncadd [#allocation4], 0
      %s2118 = sshll.u32 [#allocation8], 4
      %s2119 = int_to_ptr.vmem [resolvable:$true] %s2118
      %s2120 = sshll.u32 %s9, 4
      %s2121 = int_to_ptr.hbm [resolvable:$true] %s2120
      %2123 = dma.vmem_to_hbm [thread:$0]  %s2119, 128, %s2121, [#allocation4]
    $region53: #{tpu_custom_call.1} parent=1 // pred_fallthru
      _
    // Predicated region
    $region54: #{tpu_custom_call.1} parent=1 // pred_check
      _
    $region55: #{tpu_custom_call.1} parent=1 // pred_check_branch
      %2125 = sbr.rel (0) target = $region57
    $region56: #{tpu_custom_call.1} parent=1 // pred_region
      %2127 = vsyncadd [#allocation10], 0
      %s2128 = sshll.u32 [#allocation9], 4
      %s2129 = int_to_ptr.vmem [resolvable:$true] %s2128
      %s2130 = sshll.u32 %s10, 4
      %s2131 = int_to_ptr.hbm [resolvable:$true] %s2130
      %2136 = dma.vmem_to_hbm [thread:$0]  %s2129, 256, %s2131, [#allocation10], 128, 128, 8
    $region57: #{tpu_custom_call.1} parent=1 // pred_fallthru
      _
    // Predicated region
    $region58: #{tpu_custom_call.1} parent=1 // pred_check
      _
    $region59: #{tpu_custom_call.1} parent=1 // pred_check_branch
      %2138 = sbr.rel (0) target = $region61
    $region60: #{tpu_custom_call.1} parent=1 // pred_region
      %2140 = vsyncadd [#allocation10], 0
      %s2141 = sshll.u32 [#allocation11], 4
      %s2142 = int_to_ptr.vmem [resolvable:$true] %s2141
      %s2143 = sshll.u32 %s11, 4
      %s2144 = int_to_ptr.hbm [resolvable:$true] %s2143
      %2149 = dma.vmem_to_hbm [thread:$0]  %s2142, 256, %s2144, [#allocation10], 128, 128, 8
    $region61: #{tpu_custom_call.1} parent=1 // pred_fallthru
      _
    // Predicated region
    $region62: #{tpu_custom_call.1} parent=1 // pred_check
      _
    $region63: #{tpu_custom_call.1} parent=1 // pred_check_branch
      %2151 = sbr.rel (0) target = $region65
    $region64: #{tpu_custom_call.1} parent=1 // pred_region
      %2153 = dma.done [#allocation4], 128
    $region65: #{tpu_custom_call.1} parent=1 // pred_fallthru
      _
    // Predicated region
    $region66: #{tpu_custom_call.1} parent=1 // pred_check
      _
    $region67: #{tpu_custom_call.1} parent=1 // pred_check_branch
      %2155 = sbr.rel (0) target = $region69
    $region68: #{tpu_custom_call.1} parent=1 // pred_region
      %2157 = dma.done [#allocation10], 256
    $region69: #{tpu_custom_call.1} parent=1 // pred_fallthru
      _
    // Predicated region
    $region70: #{tpu_custom_call.1} parent=1 // pred_check
      _
    $region71: #{tpu_custom_call.1} parent=1 // pred_check_branch
      %2159 = sbr.rel (0) target = $region73
    $region72: #{tpu_custom_call.1} parent=1 // pred_region
      %2161 = dma.done [#allocation10], 256
    $region73: #{tpu_custom_call.1} parent=1 // pred_fallthru
      _
    %2162 = vsyncpa [#allocation3], 1
    %2163 = vsyncpa [#allocation6], 1
    %2164 = vsyncpa [#allocation4], 1
    %2165 = vsyncpa [#allocation10], 1

</llo_original>
